<compile_context>
chip_gen: v5e
topology: v5e:2x2
jax: 0.10.0
libtpu: 0.0.40
codegen_flags: <defaults>
</compile_context>

<pallas_src>
import functools
import math

import jax
import jax.numpy as jnp
from jax import lax
from jax.experimental import pallas as pl
from jax.experimental.pallas import tpu as pltpu


_TILE_M_TARGET = 256     # rows per grid step (multiple of 8)
_TILE_N_TARGET = 512     # column / mid-dim tile (multiple of 128)
_ATTN_SEQ_TILE = 256     # q / kv sequence tile for flash attention


# ------------------------- small helpers -------------------------

@functools.lru_cache(maxsize=None)
def _vmem_limit():
    """Generation-dependent VMEM budget: ~100 MiB on 128-MiB parts, ~51 MiB on v7x."""
    cap = 64 * 1024 * 1024
    try:
        info = pltpu.get_tpu_info()
        cap = int(getattr(info, "vmem_capacity_bytes", cap))
    except Exception:
        pass
    return min(int(cap * 0.8), 100 * 1024 * 1024)


def _row_tile(M):
    # Either the whole dim (always legal) or a 256-row tile (multiple of 8) with a cdiv grid.
    return M if M <= _TILE_M_TARGET else _TILE_M_TARGET


def _col_tile(N):
    # Either the whole dim (always legal) or a 512-wide tile (multiple of 128) with a cdiv grid.
    return N if N <= _TILE_N_TARGET else _TILE_N_TARGET


def _layernorm(x, gamma, beta, eps):
    mean = jnp.mean(x, axis=-1, keepdims=True)
    var = jnp.mean(jnp.square(x - mean), axis=-1, keepdims=True)
    return (x - mean) * lax.rsqrt(var + eps) * gamma + beta


# ------------------------- 1) fused LayerNorm + QKV projection -------------------------

def _ln_qkv_kernel(x_ref, g_ref, b_ref, wq_ref, wk_ref, wv_ref, bq_ref, bk_ref, bv_ref,
                   q_ref, k_ref, v_ref, xn_ref, *, eps):
    # LayerNorm computed once per row tile (j == 0), cached in VMEM scratch (bf16 for the MXU).
    @pl.when(pl.program_id(1) == 0)
    def _():
        x = x_ref[...].astype(jnp.float32)
        xn_ref[...] = _layernorm(x, g_ref[...], b_ref[...], eps).astype(xn_ref.dtype)

    xn = xn_ref[...]
    q_ref[...] = (jnp.dot(xn, wq_ref[...], preferred_element_type=jnp.float32)
                  + bq_ref[...]).astype(q_ref.dtype)
    k_ref[...] = (jnp.dot(xn, wk_ref[...], preferred_element_type=jnp.float32)
                  + bk_ref[...]).astype(k_ref.dtype)
    v_ref[...] = (jnp.dot(xn, wv_ref[...], preferred_element_type=jnp.float32)
                  + bv_ref[...]).astype(v_ref.dtype)


def fused_ln_qkv(x2d, gamma, beta, wq, wk, wv, bq, bk, bv, eps=1e-5):
    M, D = x2d.shape
    tm = _row_tile(M)
    tn = _col_tile(D)
    wspec = pl.BlockSpec((D, tn), lambda i, j: (0, j))
    bspec = pl.BlockSpec((1, tn), lambda i, j: (0, j))
    ospec = pl.BlockSpec((tm, tn), lambda i, j: (i, j))
    q2d, k2d, v2d = pl.pallas_call(
        functools.partial(_ln_qkv_kernel, eps=eps),
        out_shape=tuple(jax.ShapeDtypeStruct((M, D), x2d.dtype) for _ in range(3)),
        grid=(pl.cdiv(M, tm), pl.cdiv(D, tn)),
        in_specs=[
            pl.BlockSpec((tm, D), lambda i, j: (i, 0)),
            pl.BlockSpec((1, D), lambda i, j: (0, 0)),
            pl.BlockSpec((1, D), lambda i, j: (0, 0)),
            wspec, wspec, wspec, bspec, bspec, bspec,
        ],
        out_specs=(ospec, ospec, ospec),
        scratch_shapes=[pltpu.VMEM((tm, D), x2d.dtype)],   # cached LayerNorm(x)
        compiler_params=pltpu.CompilerParams(
            # N axis must be "arbitrary": the LN scratch is (re)computed at j == 0.
            dimension_semantics=("parallel", "arbitrary"),
            vmem_limit_bytes=_vmem_limit()),
    )(x2d, gamma.reshape(1, D), beta.reshape(1, D), wq, wk, wv,
      bq.reshape(1, D), bk.reshape(1, D), bv.reshape(1, D))
    return q2d, k2d, v2d


# ------------------------- 2) flash causal attention (KV-tiled, online softmax) -------------------------

def _flash_attn_kernel(q_ref, k_ref, v_ref, o_ref, m_sc, l_sc, acc_sc,
                       *, scale, num_heads, seq_len):
    qi = pl.program_id(1)
    kv = pl.program_id(2)
    tq = q_ref.shape[1]
    tk = k_ref.shape[1]
    Dh = q_ref.shape[2] // num_heads

    @pl.when(kv == 0)
    def _():
        m_sc[...] = jnp.full(m_sc.shape, -jnp.inf, jnp.float32)
        l_sc[...] = jnp.zeros(l_sc.shape, jnp.float32)
        acc_sc[...] = jnp.zeros(acc_sc.shape, jnp.float32)

    q_start = qi * tq
    k_start = kv * tk

    # Skip KV tiles that are entirely in the future of this q tile (causal).
    @pl.when(k_start <= q_start + tq - 1)
    def _():
        q = q_ref[0] * scale                        # scale folded into q (bf16)
        k = k_ref[0]
        v = v_ref[0]
        row = q_start + lax.broadcasted_iota(jnp.int32, (tq, tk), 0)
        col = k_start + lax.broadcasted_iota(jnp.int32, (tq, tk), 1)
        mask = (col <= row) & (col < seq_len)       # causal + ragged-tail KV mask
        # Heads handled by a static loop (Dh < 128 forbids a head-sliced BlockSpec; Mosaic
        # would unroll a head-batched dot_general to per-head matmuls anyway).
        for h in range(num_heads):
            sl = slice(h * Dh, (h + 1) * Dh)
            s = lax.dot_general(q[:, sl], k[:, sl], (((1,), (1,)), ((), ())),
                                preferred_element_type=jnp.float32)    # (tq, tk)
            s = jnp.where(mask, s, -1e30)
            m_prev = m_sc[:, h:h + 1]
            m_new = jnp.maximum(m_prev, jnp.max(s, axis=-1, keepdims=True))
            alpha = jnp.exp(m_prev - m_new)
            p = jnp.exp(s - m_new)
            l_sc[:, h:h + 1] = alpha * l_sc[:, h:h + 1] + jnp.sum(p, axis=-1, keepdims=True)
            acc_sc[h] = alpha * acc_sc[h] + jnp.dot(p.astype(v.dtype), v[:, sl],
                                                    preferred_element_type=jnp.float32)
            m_sc[:, h:h + 1] = m_new

    @pl.when(kv == pl.num_programs(2) - 1)
    def _():
        parts = []
        for h in range(num_heads):
            inv = pl.reciprocal(l_sc[:, h:h + 1], approx=True)   # EUP slot
            parts.append((acc_sc[h] * inv).astype(o_ref.dtype))
        o_ref[0] = jnp.concatenate(parts, axis=-1)               # lane-dense (tq, D) store


def flash_causal_attention(q, k, v, num_heads):
    # q, k, v, out: (B, L, D) with D = H * Dh  (no head transposes outside the kernel).
    B, L, D = q.shape
    Dh = D // num_heads
    scale = 1.0 / math.sqrt(Dh)
    tq = L if L <= _ATTN_SEQ_TILE else _ATTN_SEQ_TILE
    tk = L if L <= _ATTN_SEQ_TILE else _ATTN_SEQ_TILE
    return pl.pallas_call(
        functools.partial(_flash_attn_kernel, scale=scale, num_heads=num_heads, seq_len=L),
        out_shape=jax.ShapeDtypeStruct((B, L, D), q.dtype),
        grid=(B, pl.cdiv(L, tq), pl.cdiv(L, tk)),
        in_specs=[pl.BlockSpec((1, tq, D), lambda b, i, j: (b, i, 0)),
                  pl.BlockSpec((1, tk, D), lambda b, i, j: (b, j, 0)),
                  pl.BlockSpec((1, tk, D), lambda b, i, j: (b, j, 0))],
        out_specs=pl.BlockSpec((1, tq, D), lambda b, i, j: (b, i, 0)),
        scratch_shapes=[pltpu.VMEM((tq, num_heads), jnp.float32),        # running max m
                        pltpu.VMEM((tq, num_heads), jnp.float32),        # running sum l
                        pltpu.VMEM((num_heads, tq, Dh), jnp.float32)],   # output accumulator
        compiler_params=pltpu.CompilerParams(
            dimension_semantics=("parallel", "parallel", "arbitrary"),
            vmem_limit_bytes=_vmem_limit()),
    )(q, k, v)


# ------------------------- 3) output projection + residual -------------------------

def _linear_res_kernel(x_ref, w_ref, bias_ref, res_ref, o_ref):
    acc = jnp.dot(x_ref[...], w_ref[...], preferred_element_type=jnp.float32)
    o_ref[...] = (acc + bias_ref[...] + res_ref[...].astype(jnp.float32)).astype(o_ref.dtype)


def fused_linear_residual(x2d, w, b, res2d):
    M, K = x2d.shape
    N = w.shape[1]
    tm = _row_tile(M)
    tn = _col_tile(N)
    return pl.pallas_call(
        _linear_res_kernel,
        out_shape=jax.ShapeDtypeStruct((M, N), x2d.dtype),
        grid=(pl.cdiv(M, tm), pl.cdiv(N, tn)),
        in_specs=[pl.BlockSpec((tm, K), lambda i, j: (i, 0)),
                  pl.BlockSpec((K, tn), lambda i, j: (0, j)),
                  pl.BlockSpec((1, tn), lambda i, j: (0, j)),
                  pl.BlockSpec((tm, tn), lambda i, j: (i, j))],
        out_specs=pl.BlockSpec((tm, tn), lambda i, j: (i, j)),
        compiler_params=pltpu.CompilerParams(
            dimension_semantics=("parallel", "parallel"),
            vmem_limit_bytes=_vmem_limit()),
    )(x2d, w, b.reshape(1, N), res2d)


# ------------------------- 4) fused LayerNorm + FFN + residual -------------------------

def _ln_ffn_res_kernel(x_ref, g_ref, b_ref, w1_ref, b1_ref, w2_ref, b2_ref, o_ref,
                       xn_ref, acc_ref, *, eps, mid_dim, need_mask):
    j = pl.program_id(1)

    @pl.when(j == 0)
    def _():
        x = x_ref[...].astype(jnp.float32)
        xn_ref[...] = _layernorm(x, g_ref[...], b_ref[...], eps).astype(xn_ref.dtype)
        acc_ref[...] = x + b2_ref[...]            # residual + fc2 bias, added once

    h = jnp.dot(xn_ref[...], w1_ref[...], preferred_element_type=jnp.float32) + b1_ref[...]
    h = h * jax.nn.sigmoid(h)                     # SiLU
    if need_mask:                                 # zero junk tail columns of a ragged mid-dim tile
        tile = w1_ref.shape[1]
        col = j * tile + lax.broadcasted_iota(jnp.int32, h.shape, 1)
        h = jnp.where(col < mid_dim, h, 0.0)
    acc_ref[...] += jnp.dot(h.astype(w2_ref.dtype), w2_ref[...],
                            preferred_element_type=jnp.float32)

    @pl.when(j == pl.num_programs(1) - 1)         # write back once per row tile only
    def _():
        o_ref[...] = acc_ref[...].astype(o_ref.dtype)


def fused_ln_ffn_residual(x2d, gamma, beta, w1, b1, w2, b2, eps=1e-5):
    M, D = x2d.shape
    Dm = w1.shape[1]
    tm = _row_tile(M)
    tdm = _col_tile(Dm)
    need_mask = (Dm % tdm) != 0
    return pl.pallas_call(
        functools.partial(_ln_ffn_res_kernel, eps=eps, mid_dim=Dm, need_mask=need_mask),
        out_shape=jax.ShapeDtypeStruct((M, D), x2d.dtype),
        grid=(pl.cdiv(M, tm), pl.cdiv(Dm, tdm)),
        in_specs=[
            pl.BlockSpec((tm, D), lambda i, j: (i, 0)),
            pl.BlockSpec((1, D), lambda i, j: (0, 0)),
            pl.BlockSpec((1, D), lambda i, j: (0, 0)),
            pl.BlockSpec((D, tdm), lambda i, j: (0, j)),
            pl.BlockSpec((1, tdm), lambda i, j: (0, j)),
            pl.BlockSpec((tdm, D), lambda i, j: (j, 0)),
            pl.BlockSpec((1, D), lambda i, j: (0, 0)),
        ],
        out_specs=pl.BlockSpec((tm, D), lambda i, j: (i, 0)),
        scratch_shapes=[pltpu.VMEM((tm, D), x2d.dtype),      # cached LayerNorm(x) (bf16)
                        pltpu.VMEM((tm, D), jnp.float32)],   # f32 accumulator
        compiler_params=pltpu.CompilerParams(
            dimension_semantics=("parallel", "arbitrary"),
            vmem_limit_bytes=_vmem_limit()),
    )(x2d, gamma.reshape(1, D), beta.reshape(1, D), w1, b1.reshape(1, Dm), w2, b2.reshape(1, D))


# ------------------------- 5) fused final LayerNorm + grouped lm_head -------------------------

def _ln_head_kernel(x_ref, g_ref, b_ref, w_ref, bias_ref, o_ref, xn_ref, *, eps, num_group, dg):
    @pl.when(pl.program_id(1) == 0)
    def _():
        x = x_ref[...].astype(jnp.float32)
        xn_ref[...] = _layernorm(x, g_ref[...], b_ref[...], eps).astype(xn_ref.dtype)

    w = w_ref[...]
    bias = bias_ref[...]
    # Per-group matmuls with the *shared* head weight: no kron block-diagonal, no wasted flops.
    for gi in range(num_group):
        xg = xn_ref[:, gi * dg:(gi + 1) * dg]
        acc = jnp.dot(xg, w, preferred_element_type=jnp.float32) + bias
        o_ref[:, gi, :] = acc.astype(o_ref.dtype)


def fused_ln_lm_head(x2d, gamma, beta, w_head, b_head, num_group, eps=1e-5):
    M, D = x2d.shape
    dg, V = w_head.shape
    tm = _row_tile(M)
    tv = _col_tile(V)
    return pl.pallas_call(
        functools.partial(_ln_head_kernel, eps=eps, num_group=num_group, dg=dg),
        out_shape=jax.ShapeDtypeStruct((M, num_group, V), jnp.float32),
        grid=(pl.cdiv(M, tm), pl.cdiv(V, tv)),
        in_specs=[
            pl.BlockSpec((tm, D), lambda i, j: (i, 0)),
            pl.BlockSpec((1, D), lambda i, j: (0, 0)),
            pl.BlockSpec((1, D), lambda i, j: (0, 0)),
            pl.BlockSpec((dg, tv), lambda i, j: (0, j)),
            pl.BlockSpec((1, tv), lambda i, j: (0, j)),
        ],
        out_specs=pl.BlockSpec((tm, num_group, tv), lambda i, j: (i, 0, j)),
        scratch_shapes=[pltpu.VMEM((tm, D), x2d.dtype)],    # cached final LayerNorm(x)
        compiler_params=pltpu.CompilerParams(
            dimension_semantics=("parallel", "arbitrary"),
            vmem_limit_bytes=_vmem_limit()),
    )(x2d, gamma.reshape(1, D), beta.reshape(1, D), w_head, b_head.reshape(1, V))


# ------------------------- model glue (plain JAX, jitted) -------------------------

def init_params(key, cfg):
    std = cfg["init_std"]
    D = cfg["embed_dim"]
    g = cfg["num_group"]
    dg = D // g
    V = cfg["vocab_size"]
    C = cfg["num_class"]
    Dm = cfg["mid_dim"]
    keys = iter(jax.random.split(key, 256))

    def nrm(shape):
        return (std * jax.random.normal(next(keys), shape, dtype=jnp.float32)).astype(jnp.bfloat16)

    params = {
        "token_embed": nrm((V, dg)),          # nn.Embedding(vocab_size, embed_dim // num_group)
        "class_embed": nrm((C + 1, D)),       # +1 CFG row since class_dropout_prob > 0
        "final_g": jnp.ones((D,), jnp.float32),
        "final_b": jnp.zeros((D,), jnp.float32),
        "w_head": nrm((dg, V)),               # lm_head: Linear(embed_dim // num_group, vocab_size)
        "b_head": jnp.zeros((V,), jnp.float32),
        "layers": [],
    }
    for _ in range(cfg["num_layers"]):
        params["layers"].append({
            "ln1_g": jnp.ones((D,), jnp.float32), "ln1_b": jnp.zeros((D,), jnp.float32),
            "ln2_g": jnp.ones((D,), jnp.float32), "ln2_b": jnp.zeros((D,), jnp.float32),
            "wq": nrm((D, D)), "bq": jnp.zeros((D,), jnp.float32),
            "wk": nrm((D, D)), "bk": jnp.zeros((D,), jnp.float32),
            "wv": nrm((D, D)), "bv": jnp.zeros((D,), jnp.float32),
            "wo": nrm((D, D)), "bo": jnp.zeros((D,), jnp.float32),
            "w1": nrm((D, Dm)), "b1": jnp.zeros((Dm,), jnp.float32),
            "w2": nrm((Dm, D)), "b2": jnp.zeros((D,), jnp.float32),
        })
    return params


def transformer_forward(params, cfg, idx, cond_idx):
    B, n, g = idx.shape
    D = cfg["embed_dim"]
    H = cfg["num_heads"]
    Dh = D // H
    V = cfg["vocab_size"]

    # --- embeddings (gather lookups: glue, not the hot path) ---
    tok = jnp.take(params["token_embed"], idx, axis=0).reshape(B, n, D)   # '... g d -> ... (g d)'
    cls = jnp.take(params["class_embed"], cond_idx, axis=0)[:, None, :]   # ClassEmbedder (eval)
    x = jnp.concatenate([cls, tok], axis=-2)                              # (B, L, D) bf16
    L = x.shape[1]
    M = B * L
    x2d = x.reshape(M, D)

    # TODO(synk): SinCosPe (cfg.use_ape) source not provided; use_ape=False path is taken.

    new_past_key_values = []
    for layer in params["layers"]:
        # --- token mixer ---
        q2d, k2d, v2d = fused_ln_qkv(x2d, layer["ln1_g"], layer["ln1_b"],
                                     layer["wq"], layer["wk"], layer["wv"],
                                     layer["bq"], layer["bk"], layer["bv"])       # 3 x (M, D)
        q = q2d.reshape(B, L, D)    # free reshapes, no transposes
        k = k2d.reshape(B, L, D)
        v = v2d.reshape(B, L, D)
        o = flash_causal_attention(q, k, v, H)                                    # (B, L, D)
        x2d = fused_linear_residual(o.reshape(M, D), layer["wo"], layer["bo"], x2d)
        # KV cache kept in (B, L, H, Dh) layout (free reshape of the projection output).
        new_past_key_values.append((k.reshape(B, L, H, Dh), v.reshape(B, L, H, Dh)))

        # --- channel mixer: LN + fc1 + SiLU + fc2 + residual in one kernel ---
        x2d = fused_ln_ffn_residual(x2d, layer["ln2_g"], layer["ln2_b"],
                                    layer["w1"], layer["b1"], layer["w2"], layer["b2"])

    # --- final norm + grouped lm_head (per-group matmul against the shared head weight) ---
    logits = fused_ln_lm_head(x2d, params["final_g"], params["final_b"],
                              params["w_head"], params["b_head"], g)
    logits = logits.reshape(B, L, g, V)
    return logits, new_past_key_values       # eval mode -> no logits[:, :-1]


if __name__ == "__main__":
    cfg = dict(
        vocab_size=16, num_class=4, embed_dim=32, num_heads=2, num_group=2,
        num_layers=2, mid_dim=64, init_std=0.02, class_dropout_prob=0.1,
        norm_type="layernorm", bias=True, theta_base=10000.0, use_ape=False,
        channel_act="silu", channel_mixer="ffn", use_lrpe=False,
    )
    key = jax.random.PRNGKey(0)
    pkey, ikey, ckey = jax.random.split(key, 3)
    params = init_params(pkey, cfg)

    B, n = 2, 7  # total sequence L = 1 (class token) + 7 = 8
    idx = jax.random.randint(ikey, (B, n, cfg["num_group"]), 0, cfg["vocab_size"], dtype=jnp.int32)
    cond_idx = jax.random.randint(ckey, (B,), 0, cfg["num_class"], dtype=jnp.int32)

    fwd = jax.jit(lambda p, i, c: transformer_forward(p, cfg, i, c))
    logits, new_past = fwd(params, idx, cond_idx)
    logits = jax.block_until_ready(logits)

    assert logits.shape == (B, 1 + n, cfg["num_group"], cfg["vocab_size"])
    assert bool(jnp.all(jnp.isfinite(logits)))
    assert new_past[0][0].shape == (B, 1 + n, cfg["num_heads"],
                                    cfg["embed_dim"] // cfg["num_heads"])
    print("KERNEL_OK")
</pallas_src>

<mosaic_0001>
module attributes {stable_mosaic.version = 11 : i64} {
  func.func @_ln_ffn_res_kernel(%arg0: i32, %arg1: i32, %arg2: memref<16x32xbf16, #tpu.memory_space<vmem>>, %arg3: memref<1x32xf32, #tpu.memory_space<vmem>>, %arg4: memref<1x32xf32, #tpu.memory_space<vmem>>, %arg5: memref<32x64xbf16, #tpu.memory_space<vmem>>, %arg6: memref<1x64xf32, #tpu.memory_space<vmem>>, %arg7: memref<64x32xbf16, #tpu.memory_space<vmem>>, %arg8: memref<1x32xf32, #tpu.memory_space<vmem>>, %arg9: memref<16x32xbf16, #tpu.memory_space<vmem>>, %arg10: memref<16x32xbf16, #tpu.memory_space<vmem>>, %arg11: memref<16x32xf32, #tpu.memory_space<vmem>>) attributes {dimension_semantics = [#tpu.dimension_semantics<parallel>, #tpu.dimension_semantics<arbitrary>], iteration_bounds = array<i64: 1, 1>, scalar_prefetch = 0 : i64, scratch_operands = 2 : i64, tpu.core_type = #tpu.core_type<tc>, window_params = [{transform_indices = @transform_0, window_bounds = array<i64: 16, 32>}, {pipeline_mode = #tpu.pipeline_mode<synchronous>, transform_indices = @transform_1, window_bounds = array<i64: 1, 32>}, {pipeline_mode = #tpu.pipeline_mode<synchronous>, transform_indices = @transform_2, window_bounds = array<i64: 1, 32>}, {transform_indices = @transform_3, window_bounds = array<i64: 32, 64>}, {transform_indices = @transform_4, window_bounds = array<i64: 1, 64>}, {transform_indices = @transform_5, window_bounds = array<i64: 64, 32>}, {pipeline_mode = #tpu.pipeline_mode<synchronous>, transform_indices = @transform_6, window_bounds = array<i64: 1, 32>}, {transform_indices = @transform_7, window_bounds = array<i64: 16, 32>}]} {
    %c0_i32 = arith.constant 0 : i32
    %0 = arith.cmpi eq, %arg1, %c0_i32 : i32
    %1 = arith.extui %0 : i1 to i32
    %c0_i32_0 = arith.constant 0 : i32
    %2 = arith.cmpi ne, %1, %c0_i32_0 : i32
    scf.if %2 {
      %c0_16 = arith.constant 0 : index
      %c0_17 = arith.constant 0 : index
      %24 = vector.load %arg2[%c0_16, %c0_17] : memref<16x32xbf16, #tpu.memory_space<vmem>>, vector<16x32xbf16>
      %25 = arith.extf %24 : vector<16x32xbf16> to vector<16x32xf32>
      %c0_18 = arith.constant 0 : index
      %c0_19 = arith.constant 0 : index
      %26 = vector.load %arg3[%c0_18, %c0_19] : memref<1x32xf32, #tpu.memory_space<vmem>>, vector<1x32xf32>
      %c0_20 = arith.constant 0 : index
      %c0_21 = arith.constant 0 : index
      %27 = vector.load %arg4[%c0_20, %c0_21] : memref<1x32xf32, #tpu.memory_space<vmem>>, vector<1x32xf32>
      %cst_22 = arith.constant dense<0.000000e+00> : vector<16xf32>
      %28 = vector.multi_reduction <add>, %25, %cst_22 [1] : vector<16x32xf32> to vector<16xf32>
      %29 = vector.shape_cast %28 : vector<16xf32> to vector<16x1xf32>
      %cst_23 = arith.constant 3.200000e+01 : f32
      %30 = vector.broadcast %cst_23 : f32 to vector<16x1xf32>
      %31 = arith.divf %29, %30 : vector<16x1xf32>
      %32 = vector.broadcast %31 : vector<16x1xf32> to vector<16x32xf32>
      %33 = arith.subf %25, %32 : vector<16x32xf32>
      %34 = arith.mulf %33, %33 : vector<16x32xf32>
      %cst_24 = arith.constant dense<0.000000e+00> : vector<16xf32>
      %35 = vector.multi_reduction <add>, %34, %cst_24 [1] : vector<16x32xf32> to vector<16xf32>
      %36 = vector.shape_cast %35 : vector<16xf32> to vector<16x1xf32>
      %cst_25 = arith.constant 3.200000e+01 : f32
      %37 = vector.broadcast %cst_25 : f32 to vector<16x1xf32>
      %38 = arith.divf %36, %37 : vector<16x1xf32>
      %39 = vector.broadcast %31 : vector<16x1xf32> to vector<16x32xf32>
      %40 = arith.subf %25, %39 : vector<16x32xf32>
      %cst_26 = arith.constant 9.99999974E-6 : f32
      %41 = vector.broadcast %cst_26 : f32 to vector<16x1xf32>
      %42 = arith.addf %38, %41 : vector<16x1xf32>
      %43 = math.rsqrt %42 : vector<16x1xf32>
      %44 = vector.broadcast %43 : vector<16x1xf32> to vector<16x32xf32>
      %45 = arith.mulf %40, %44 : vector<16x32xf32>
      %46 = vector.broadcast %26 : vector<1x32xf32> to vector<16x32xf32>
      %47 = arith.mulf %45, %46 : vector<16x32xf32>
      %48 = vector.broadcast %27 : vector<1x32xf32> to vector<16x32xf32>
      %49 = arith.addf %47, %48 : vector<16x32xf32>
      %50 = arith.truncf %49 : vector<16x32xf32> to vector<16x32xbf16>
      %c0_27 = arith.constant 0 : index
      %c0_28 = arith.constant 0 : index
      %51 = vector.load %arg10[%c0_27, %c0_28] : memref<16x32xbf16, #tpu.memory_space<vmem>>, vector<16x32xbf16>
      tpu.vector_store %arg10[%c0_27, %c0_28], %50 {strides = array<i32>} : memref<16x32xbf16, #tpu.memory_space<vmem>>, vector<16x32xbf16>,
      %c0_29 = arith.constant 0 : index
      %c0_30 = arith.constant 0 : index
      %52 = vector.load %arg8[%c0_29, %c0_30] : memref<1x32xf32, #tpu.memory_space<vmem>>, vector<1x32xf32>
      %53 = vector.broadcast %52 : vector<1x32xf32> to vector<16x32xf32>
      %54 = arith.addf %25, %53 : vector<16x32xf32>
      %c0_31 = arith.constant 0 : index
      %c0_32 = arith.constant 0 : index
      %55 = vector.load %arg11[%c0_31, %c0_32] : memref<16x32xf32, #tpu.memory_space<vmem>>, vector<16x32xf32>
      tpu.vector_store %arg11[%c0_31, %c0_32], %54 {strides = array<i32>} : memref<16x32xf32, #tpu.memory_space<vmem>>, vector<16x32xf32>,
    } else {
    }
    %c0 = arith.constant 0 : index
    %c0_1 = arith.constant 0 : index
    %3 = vector.load %arg10[%c0, %c0_1] : memref<16x32xbf16, #tpu.memory_space<vmem>>, vector<16x32xbf16>
    %c0_2 = arith.constant 0 : index
    %c0_3 = arith.constant 0 : index
    %4 = vector.load %arg5[%c0_2, %c0_3] : memref<32x64xbf16, #tpu.memory_space<vmem>>, vector<32x64xbf16>
    %cst = arith.constant dense<0.000000e+00> : vector<16x64xf32>
    %5 = tpu.matmul %3, %4, %cst {dimension_numbers = #tpu.dot_dimension_numbers<[1], [0], [0], [1], [0, 0, 1, 1], [], []>} : vector<16x32xbf16>, vector<32x64xbf16>, vector<16x64xf32> -> vector<16x64xf32>
    %c0_4 = arith.constant 0 : index
    %c0_5 = arith.constant 0 : index
    %6 = vector.load %arg6[%c0_4, %c0_5] : memref<1x64xf32, #tpu.memory_space<vmem>>, vector<1x64xf32>
    %7 = vector.broadcast %6 : vector<1x64xf32> to vector<16x64xf32>
    %8 = arith.addf %5, %7 : vector<16x64xf32>
    %9 = arith.negf %8 : vector<16x64xf32>
    %10 = math.exp %9 : vector<16x64xf32>
    %cst_6 = arith.constant 1.000000e+00 : f32
    %11 = vector.broadcast %cst_6 : f32 to vector<16x64xf32>
    %12 = arith.addf %11, %10 : vector<16x64xf32>
    %13 = arith.divf %11, %12 : vector<16x64xf32>
    %14 = arith.mulf %8, %13 : vector<16x64xf32>
    %c0_7 = arith.constant 0 : index
    %c0_8 = arith.constant 0 : index
    %15 = vector.load %arg11[%c0_7, %c0_8] : memref<16x32xf32, #tpu.memory_space<vmem>>, vector<16x32xf32>
    %16 = arith.truncf %14 : vector<16x64xf32> to vector<16x64xbf16>
    %c0_9 = arith.constant 0 : index
    %c0_10 = arith.constant 0 : index
    %17 = vector.load %arg7[%c0_9, %c0_10] : memref<64x32xbf16, #tpu.memory_space<vmem>>, vector<64x32xbf16>
    %cst_11 = arith.constant dense<0.000000e+00> : vector<16x32xf32>
    %18 = tpu.matmul %16, %17, %cst_11 {dimension_numbers = #tpu.dot_dimension_numbers<[1], [0], [0], [1], [0, 0, 1, 1], [], []>} : vector<16x64xbf16>, vector<64x32xbf16>, vector<16x32xf32> -> vector<16x32xf32>
    %19 = arith.addf %15, %18 : vector<16x32xf32>
    %c0_12 = arith.constant 0 : index
    %c0_13 = arith.constant 0 : index
    %20 = vector.load %arg11[%c0_12, %c0_13] : memref<16x32xf32, #tpu.memory_space<vmem>>, vector<16x32xf32>
    tpu.vector_store %arg11[%c0_12, %c0_13], %19 {strides = array<i32>} : memref<16x32xf32, #tpu.memory_space<vmem>>, vector<16x32xf32>,
    %c0_i32_14 = arith.constant 0 : i32
    %21 = arith.cmpi eq, %arg1, %c0_i32_14 : i32
    %22 = arith.extui %21 : i1 to i32
    %c0_i32_15 = arith.constant 0 : i32
    %23 = arith.cmpi ne, %22, %c0_i32_15 : i32
    scf.if %23 {
      %c0_16 = arith.constant 0 : index
      %c0_17 = arith.constant 0 : index
      %24 = vector.load %arg11[%c0_16, %c0_17] : memref<16x32xf32, #tpu.memory_space<vmem>>, vector<16x32xf32>
      %25 = arith.truncf %24 : vector<16x32xf32> to vector<16x32xbf16>
      %c0_18 = arith.constant 0 : index
      %c0_19 = arith.constant 0 : index
      %26 = vector.load %arg9[%c0_18, %c0_19] : memref<16x32xbf16, #tpu.memory_space<vmem>>, vector<16x32xbf16>
      tpu.vector_store %arg9[%c0_18, %c0_19], %25 {strides = array<i32>} : memref<16x32xbf16, #tpu.memory_space<vmem>>, vector<16x32xbf16>,
    } else {
    }
    return
  }
  func.func @transform_0(%arg0: i32, %arg1: i32) -> (i32, i32) {
    %c0_i32 = arith.constant 0 : i32
    %c0_i32_0 = arith.constant 0 : i32
    return %arg0, %c0_i32 : i32, i32
  }
  func.func @transform_1(%arg0: i32, %arg1: i32) -> (i32, i32) {
    %c0_i32 = arith.constant 0 : i32
    %c0_i32_0 = arith.constant 0 : i32
    %c0_i32_1 = arith.constant 0 : i32
    return %c0_i32, %c0_i32_0 : i32, i32
  }
  func.func @transform_2(%arg0: i32, %arg1: i32) -> (i32, i32) {
    %c0_i32 = arith.constant 0 : i32
    %c0_i32_0 = arith.constant 0 : i32
    %c0_i32_1 = arith.constant 0 : i32
    return %c0_i32, %c0_i32_0 : i32, i32
  }
  func.func @transform_3(%arg0: i32, %arg1: i32) -> (i32, i32) {
    %c0_i32 = arith.constant 0 : i32
    %c0_i32_0 = arith.constant 0 : i32
    return %c0_i32, %arg1 : i32, i32
  }
  func.func @transform_4(%arg0: i32, %arg1: i32) -> (i32, i32) {
    %c0_i32 = arith.constant 0 : i32
    %c0_i32_0 = arith.constant 0 : i32
    return %c0_i32, %arg1 : i32, i32
  }
  func.func @transform_5(%arg0: i32, %arg1: i32) -> (i32, i32) {
    %c0_i32 = arith.constant 0 : i32
    %c0_i32_0 = arith.constant 0 : i32
    return %arg1, %c0_i32 : i32, i32
  }
  func.func @transform_6(%arg0: i32, %arg1: i32) -> (i32, i32) {
    %c0_i32 = arith.constant 0 : i32
    %c0_i32_0 = arith.constant 0 : i32
    %c0_i32_1 = arith.constant 0 : i32
    return %c0_i32, %c0_i32_0 : i32, i32
  }
  func.func @transform_7(%arg0: i32, %arg1: i32) -> (i32, i32) {
    %c0_i32 = arith.constant 0 : i32
    %c0_i32_0 = arith.constant 0 : i32
    return %arg0, %c0_i32 : i32, i32
  }
}

module attributes {stable_mosaic.version = 11 : i64} {
  func.func @_linear_res_kernel(%arg0: i32, %arg1: i32, %arg2: memref<16x32xbf16, #tpu.memory_space<vmem>>, %arg3: memref<32x32xbf16, #tpu.memory_space<vmem>>, %arg4: memref<1x32xf32, #tpu.memory_space<vmem>>, %arg5: memref<16x32xbf16, #tpu.memory_space<vmem>>, %arg6: memref<16x32xbf16, #tpu.memory_space<vmem>>) attributes {dimension_semantics = [#tpu.dimension_semantics<parallel>, #tpu.dimension_semantics<parallel>], iteration_bounds = array<i64: 1, 1>, scalar_prefetch = 0 : i64, scratch_operands = 0 : i64, tpu.core_type = #tpu.core_type<tc>, window_params = [{transform_indices = @transform_0, window_bounds = array<i64: 16, 32>}, {transform_indices = @transform_1, window_bounds = array<i64: 32, 32>}, {transform_indices = @transform_2, window_bounds = array<i64: 1, 32>}, {transform_indices = @transform_3, window_bounds = array<i64: 16, 32>}, {transform_indices = @transform_4, window_bounds = array<i64: 16, 32>}]} {
    %c0 = arith.constant 0 : index
    %c0_0 = arith.constant 0 : index
    %0 = vector.load %arg2[%c0, %c0_0] : memref<16x32xbf16, #tpu.memory_space<vmem>>, vector<16x32xbf16>
    %c0_1 = arith.constant 0 : index
    %c0_2 = arith.constant 0 : index
    %1 = vector.load %arg3[%c0_1, %c0_2] : memref<32x32xbf16, #tpu.memory_space<vmem>>, vector<32x32xbf16>
    %cst = arith.constant dense<0.000000e+00> : vector<16x32xf32>
    %2 = tpu.matmul %0, %1, %cst {dimension_numbers = #tpu.dot_dimension_numbers<[1], [0], [0], [1], [0, 0, 1, 1], [], []>} : vector<16x32xbf16>, vector<32x32xbf16>, vector<16x32xf32> -> vector<16x32xf32>
    %c0_3 = arith.constant 0 : index
    %c0_4 = arith.constant 0 : index
    %3 = vector.load %arg4[%c0_3, %c0_4] : memref<1x32xf32, #tpu.memory_space<vmem>>, vector<1x32xf32>
    %4 = vector.broadcast %3 : vector<1x32xf32> to vector<16x32xf32>
    %5 = arith.addf %2, %4 : vector<16x32xf32>
    %c0_5 = arith.constant 0 : index
    %c0_6 = arith.constant 0 : index
    %6 = vector.load %arg5[%c0_5, %c0_6] : memref<16x32xbf16, #tpu.memory_space<vmem>>, vector<16x32xbf16>
    %7 = arith.extf %6 : vector<16x32xbf16> to vector<16x32xf32>
    %8 = arith.addf %5, %7 : vector<16x32xf32>
    %9 = arith.truncf %8 : vector<16x32xf32> to vector<16x32xbf16>
    %c0_7 = arith.constant 0 : index
    %c0_8 = arith.constant 0 : index
    %10 = vector.load %arg6[%c0_7, %c0_8] : memref<16x32xbf16, #tpu.memory_space<vmem>>, vector<16x32xbf16>
    tpu.vector_store %arg6[%c0_7, %c0_8], %9 {strides = array<i32>} : memref<16x32xbf16, #tpu.memory_space<vmem>>, vector<16x32xbf16>,
    return
  }
  func.func @transform_0(%arg0: i32, %arg1: i32) -> (i32, i32) {
    %c0_i32 = arith.constant 0 : i32
    %c0_i32_0 = arith.constant 0 : i32
    return %arg0, %c0_i32 : i32, i32
  }
  func.func @transform_1(%arg0: i32, %arg1: i32) -> (i32, i32) {
    %c0_i32 = arith.constant 0 : i32
    %c0_i32_0 = arith.constant 0 : i32
    return %c0_i32, %arg1 : i32, i32
  }
  func.func @transform_2(%arg0: i32, %arg1: i32) -> (i32, i32) {
    %c0_i32 = arith.constant 0 : i32
    %c0_i32_0 = arith.constant 0 : i32
    return %c0_i32, %arg1 : i32, i32
  }
  func.func @transform_3(%arg0: i32, %arg1: i32) -> (i32, i32) {
    %c0_i32 = arith.constant 0 : i32
    return %arg0, %arg1 : i32, i32
  }
  func.func @transform_4(%arg0: i32, %arg1: i32) -> (i32, i32) {
    %c0_i32 = arith.constant 0 : i32
    return %arg0, %arg1 : i32, i32
  }
}

module attributes {stable_mosaic.version = 11 : i64} {
  func.func @_flash_attn_kernel(%arg0: i32, %arg1: i32, %arg2: i32, %arg3: memref<1x8x32xbf16, #tpu.memory_space<vmem>>, %arg4: memref<1x8x32xbf16, #tpu.memory_space<vmem>>, %arg5: memref<1x8x32xbf16, #tpu.memory_space<vmem>>, %arg6: memref<1x8x32xbf16, #tpu.memory_space<vmem>>, %arg7: memref<8x2xf32, #tpu.memory_space<vmem>>, %arg8: memref<8x2xf32, #tpu.memory_space<vmem>>, %arg9: memref<2x8x16xf32, #tpu.memory_space<vmem>>) attributes {dimension_semantics = [#tpu.dimension_semantics<parallel>, #tpu.dimension_semantics<parallel>, #tpu.dimension_semantics<arbitrary>], iteration_bounds = array<i64: 2, 1, 1>, scalar_prefetch = 0 : i64, scratch_operands = 3 : i64, tpu.core_type = #tpu.core_type<tc>, window_params = [{transform_indices = @transform_0, window_bounds = array<i64: 1, 8, 32>}, {transform_indices = @transform_1, window_bounds = array<i64: 1, 8, 32>}, {transform_indices = @transform_2, window_bounds = array<i64: 1, 8, 32>}, {transform_indices = @transform_3, window_bounds = array<i64: 1, 8, 32>}]} {
    %c0_i32 = arith.constant 0 : i32
    %0 = arith.cmpi eq, %arg2, %c0_i32 : i32
    %1 = arith.extui %0 : i1 to i32
    %c0_i32_0 = arith.constant 0 : i32
    %2 = arith.cmpi ne, %1, %c0_i32_0 : i32
    scf.if %2 {
      %cst = arith.constant 0xFF800000 : f32
      %13 = vector.broadcast %cst : f32 to vector<8x2xf32>
      %c0 = arith.constant 0 : index
      %c0_6 = arith.constant 0 : index
      %14 = vector.load %arg7[%c0, %c0_6] : memref<8x2xf32, #tpu.memory_space<vmem>>, vector<8x2xf32>
      tpu.vector_store %arg7[%c0, %c0_6], %13 {strides = array<i32>} : memref<8x2xf32, #tpu.memory_space<vmem>>, vector<8x2xf32>,
      %cst_7 = arith.constant 0.000000e+00 : f32
      %15 = vector.broadcast %cst_7 : f32 to vector<8x2xf32>
      %c0_8 = arith.constant 0 : index
      %c0_9 = arith.constant 0 : index
      %16 = vector.load %arg8[%c0_8, %c0_9] : memref<8x2xf32, #tpu.memory_space<vmem>>, vector<8x2xf32>
      tpu.vector_store %arg8[%c0_8, %c0_9], %15 {strides = array<i32>} : memref<8x2xf32, #tpu.memory_space<vmem>>, vector<8x2xf32>,
      %cst_10 = arith.constant 0.000000e+00 : f32
      %17 = vector.broadcast %cst_10 : f32 to vector<2x8x16xf32>
      %c0_11 = arith.constant 0 : index
      %c0_12 = arith.constant 0 : index
      %c0_13 = arith.constant 0 : index
      %18 = vector.load %arg9[%c0_11, %c0_12, %c0_13] : memref<2x8x16xf32, #tpu.memory_space<vmem>>, vector<2x8x16xf32>
      tpu.vector_store %arg9[%c0_11, %c0_12, %c0_13], %17 {strides = array<i32>} : memref<2x8x16xf32, #tpu.memory_space<vmem>>, vector<2x8x16xf32>,
    } else {
    }
    %c8_i32 = arith.constant 8 : i32
    %3 = arith.muli %arg1, %c8_i32 : i32
    %c8_i32_1 = arith.constant 8 : i32
    %4 = arith.muli %arg2, %c8_i32_1 : i32
    %c8_i32_2 = arith.constant 8 : i32
    %5 = arith.addi %3, %c8_i32_2 : i32
    %c1_i32 = arith.constant 1 : i32
    %6 = arith.subi %5, %c1_i32 : i32
    %7 = arith.cmpi sle, %4, %6 : i32
    %8 = arith.extui %7 : i1 to i32
    %c0_i32_3 = arith.constant 0 : i32
    %9 = arith.cmpi ne, %8, %c0_i32_3 : i32
    scf.if %9 {
      %c0 = arith.constant 0 : index
      %c0_6 = arith.constant 0 : index
      %c0_7 = arith.constant 0 : index
      %13 = vector.load %arg3[%c0, %c0_6, %c0_7] : memref<1x8x32xbf16, #tpu.memory_space<vmem>>, vector<1x8x32xbf16>
      %14 = vector.shape_cast %13 : vector<1x8x32xbf16> to vector<8x32xbf16>
      %cst = arith.constant 2.500000e-01 : bf16
      %15 = vector.broadcast %cst : bf16 to vector<8x32xbf16>
      %16 = arith.mulf %14, %15 : vector<8x32xbf16>
      %c0_8 = arith.constant 0 : index
      %c0_9 = arith.constant 0 : index
      %c0_10 = arith.constant 0 : index
      %17 = vector.load %arg4[%c0_8, %c0_9, %c0_10] : memref<1x8x32xbf16, #tpu.memory_space<vmem>>, vector<1x8x32xbf16>
      %18 = vector.shape_cast %17 : vector<1x8x32xbf16> to vector<8x32xbf16>
      %c0_11 = arith.constant 0 : index
      %c0_12 = arith.constant 0 : index
      %c0_13 = arith.constant 0 : index
      %19 = vector.load %arg5[%c0_11, %c0_12, %c0_13] : memref<1x8x32xbf16, #tpu.memory_space<vmem>>, vector<1x8x32xbf16>
      %20 = vector.shape_cast %19 : vector<1x8x32xbf16> to vector<8x32xbf16>
      %21 = tpu.iota {dimensions = array<i32: 0>} : vector<8x8xi32>
      %22 = vector.broadcast %3 : i32 to vector<8x8xi32>
      %23 = arith.addi %22, %21 : vector<8x8xi32>
      %24 = tpu.iota {dimensions = array<i32: 1>} : vector<8x8xi32>
      %25 = vector.broadcast %4 : i32 to vector<8x8xi32>
      %26 = arith.addi %25, %24 : vector<8x8xi32>
      %27 = arith.cmpi sle, %26, %23 : vector<8x8xi32>
      %c8_i32_14 = arith.constant 8 : i32
      %28 = vector.broadcast %c8_i32_14 : i32 to vector<8x8xi32>
      %29 = arith.cmpi slt, %26, %28 : vector<8x8xi32>
      %30 = arith.andi %27, %29 : vector<8x8xi1>
      %31 = vector.extract_strided_slice %16 {offsets = [0, 0], sizes = [8, 16], strides = [1, 1]} : vector<8x32xbf16> to vector<8x16xbf16>
      %32 = vector.extract_strided_slice %18 {offsets = [0, 0], sizes = [8, 16], strides = [1, 1]} : vector<8x32xbf16> to vector<8x16xbf16>
      %cst_15 = arith.constant dense<0.000000e+00> : vector<8x8xf32>
      %33 = tpu.matmul %31, %32, %cst_15 {dimension_numbers = #tpu.dot_dimension_numbers<[1], [1], [0], [0], [0, 0, 1, 0], [], []>} : vector<8x16xbf16>, vector<8x16xbf16>, vector<8x8xf32> -> vector<8x8xf32>
      %cst_16 = arith.constant -1.000000e+30 : f32
      %34 = vector.broadcast %cst_16 : f32 to vector<8x8xf32>
      %35 = arith.select %30, %33, %34 : vector<8x8xi1>, vector<8x8xf32>
      %c0_17 = arith.constant 0 : index
      %c0_18 = arith.constant 0 : index
      %36 = vector.load %arg7[%c0_17, %c0_18] : memref<8x2xf32, #tpu.memory_space<vmem>>, vector<8x1xf32>
      %cst_19 = arith.constant dense<0xFF800000> : vector<8xf32>
      %37 = vector.multi_reduction <maximumf>, %35, %cst_19 [1] : vector<8x8xf32> to vector<8xf32>
      %38 = vector.shape_cast %37 : vector<8xf32> to vector<8x1xf32>
      %39 = arith.maximumf %36, %38 : vector<8x1xf32>
      %40 = arith.subf %36, %39 : vector<8x1xf32>
      %41 = math.exp %40 : vector<8x1xf32>
      %42 = vector.broadcast %39 : vector<8x1xf32> to vector<8x8xf32>
      %43 = arith.subf %35, %42 : vector<8x8xf32>
      %44 = math.exp %43 : vector<8x8xf32>
      %c0_20 = arith.constant 0 : index
      %c0_21 = arith.constant 0 : index
      %45 = vector.load %arg8[%c0_20, %c0_21] : memref<8x2xf32, #tpu.memory_space<vmem>>, vector<8x1xf32>
      %46 = arith.mulf %41, %45 : vector<8x1xf32>
      %cst_22 = arith.constant dense<0.000000e+00> : vector<8xf32>
      %47 = vector.multi_reduction <add>, %44, %cst_22 [1] : vector<8x8xf32> to vector<8xf32>
      %48 = vector.shape_cast %47 : vector<8xf32> to vector<8x1xf32>
      %49 = arith.addf %46, %48 : vector<8x1xf32>
      %c0_23 = arith.constant 0 : index
      %c0_24 = arith.constant 0 : index
      %50 = vector.load %arg8[%c0_23, %c0_24] : memref<8x2xf32, #tpu.memory_space<vmem>>, vector<8x1xf32>
      tpu.vector_store %arg8[%c0_23, %c0_24], %49 {strides = array<i32>} : memref<8x2xf32, #tpu.memory_space<vmem>>, vector<8x1xf32>,
      %c0_25 = arith.constant 0 : index
      %c0_26 = arith.constant 0 : index
      %c0_27 = arith.constant 0 : index
      %51 = vector.load %arg9[%c0_25, %c0_26, %c0_27] : memref<2x8x16xf32, #tpu.memory_space<vmem>>, vector<1x8x16xf32>
      %52 = vector.shape_cast %51 : vector<1x8x16xf32> to vector<8x16xf32>
      %53 = vector.broadcast %41 : vector<8x1xf32> to vector<8x16xf32>
      %54 = arith.mulf %53, %52 : vector<8x16xf32>
      %55 = arith.truncf %44 : vector<8x8xf32> to vector<8x8xbf16>
      %56 = vector.extract_strided_slice %20 {offsets = [0, 0], sizes = [8, 16], strides = [1, 1]} : vector<8x32xbf16> to vector<8x16xbf16>
      %cst_28 = arith.constant dense<0.000000e+00> : vector<8x16xf32>
      %57 = tpu.matmul %55, %56, %cst_28 {dimension_numbers = #tpu.dot_dimension_numbers<[1], [0], [0], [1], [0, 0, 1, 1], [], []>} : vector<8x8xbf16>, vector<8x16xbf16>, vector<8x16xf32> -> vector<8x16xf32>
      %58 = arith.addf %54, %57 : vector<8x16xf32>
      %c0_29 = arith.constant 0 : index
      %c0_30 = arith.constant 0 : index
      %c0_31 = arith.constant 0 : index
      %59 = vector.load %arg9[%c0_29, %c0_30, %c0_31] : memref<2x8x16xf32, #tpu.memory_space<vmem>>, vector<1x8x16xf32>
      %60 = vector.shape_cast %59 : vector<1x8x16xf32> to vector<8x16xf32>
      %61 = vector.shape_cast %58 : vector<8x16xf32> to vector<1x8x16xf32>
      tpu.vector_store %arg9[%c0_29, %c0_30, %c0_31], %61 {strides = array<i32>} : memref<2x8x16xf32, #tpu.memory_space<vmem>>, vector<1x8x16xf32>,
      %c0_32 = arith.constant 0 : index
      %c0_33 = arith.constant 0 : index
      %62 = vector.load %arg7[%c0_32, %c0_33] : memref<8x2xf32, #tpu.memory_space<vmem>>, vector<8x1xf32>
      tpu.vector_store %arg7[%c0_32, %c0_33], %39 {strides = array<i32>} : memref<8x2xf32, #tpu.memory_space<vmem>>, vector<8x1xf32>,
      %63 = vector.extract_strided_slice %16 {offsets = [0, 16], sizes = [8, 16], strides = [1, 1]} : vector<8x32xbf16> to vector<8x16xbf16>
      %64 = vector.extract_strided_slice %18 {offsets = [0, 16], sizes = [8, 16], strides = [1, 1]} : vector<8x32xbf16> to vector<8x16xbf16>
      %cst_34 = arith.constant dense<0.000000e+00> : vector<8x8xf32>
      %65 = tpu.matmul %63, %64, %cst_34 {dimension_numbers = #tpu.dot_dimension_numbers<[1], [1], [0], [0], [0, 0, 1, 0], [], []>} : vector<8x16xbf16>, vector<8x16xbf16>, vector<8x8xf32> -> vector<8x8xf32>
      %cst_35 = arith.constant -1.000000e+30 : f32
      %66 = vector.broadcast %cst_35 : f32 to vector<8x8xf32>
      %67 = arith.select %30, %65, %66 : vector<8x8xi1>, vector<8x8xf32>
      %c0_36 = arith.constant 0 : index
      %c1 = arith.constant 1 : index
      %68 = vector.load %arg7[%c0_36, %c1] : memref<8x2xf32, #tpu.memory_space<vmem>>, vector<8x1xf32>
      %cst_37 = arith.constant dense<0xFF800000> : vector<8xf32>
      %69 = vector.multi_reduction <maximumf>, %67, %cst_37 [1] : vector<8x8xf32> to vector<8xf32>
      %70 = vector.shape_cast %69 : vector<8xf32> to vector<8x1xf32>
      %71 = arith.maximumf %68, %70 : vector<8x1xf32>
      %72 = arith.subf %68, %71 : vector<8x1xf32>
      %73 = math.exp %72 : vector<8x1xf32>
      %74 = vector.broadcast %71 : vector<8x1xf32> to vector<8x8xf32>
      %75 = arith.subf %67, %74 : vector<8x8xf32>
      %76 = math.exp %75 : vector<8x8xf32>
      %c0_38 = arith.constant 0 : index
      %c1_39 = arith.constant 1 : index
      %77 = vector.load %arg8[%c0_38, %c1_39] : memref<8x2xf32, #tpu.memory_space<vmem>>, vector<8x1xf32>
      %78 = arith.mulf %73, %77 : vector<8x1xf32>
      %cst_40 = arith.constant dense<0.000000e+00> : vector<8xf32>
      %79 = vector.multi_reduction <add>, %76, %cst_40 [1] : vector<8x8xf32> to vector<8xf32>
      %80 = vector.shape_cast %79 : vector<8xf32> to vector<8x1xf32>
      %81 = arith.addf %78, %80 : vector<8x1xf32>
      %c0_41 = arith.constant 0 : index
      %c1_42 = arith.constant 1 : index
      %82 = vector.load %arg8[%c0_41, %c1_42] : memref<8x2xf32, #tpu.memory_space<vmem>>, vector<8x1xf32>
      tpu.vector_store %arg8[%c0_41, %c1_42], %81 {strides = array<i32>} : memref<8x2xf32, #tpu.memory_space<vmem>>, vector<8x1xf32>,
      %c1_43 = arith.constant 1 : index
      %c0_44 = arith.constant 0 : index
      %c0_45 = arith.constant 0 : index
      %83 = vector.load %arg9[%c1_43, %c0_44, %c0_45] : memref<2x8x16xf32, #tpu.memory_space<vmem>>, vector<1x8x16xf32>
      %84 = vector.shape_cast %83 : vector<1x8x16xf32> to vector<8x16xf32>
      %85 = vector.broadcast %73 : vector<8x1xf32> to vector<8x16xf32>
      %86 = arith.mulf %85, %84 : vector<8x16xf32>
      %87 = arith.truncf %76 : vector<8x8xf32> to vector<8x8xbf16>
      %88 = vector.extract_strided_slice %20 {offsets = [0, 16], sizes = [8, 16], strides = [1, 1]} : vector<8x32xbf16> to vector<8x16xbf16>
      %cst_46 = arith.constant dense<0.000000e+00> : vector<8x16xf32>
      %89 = tpu.matmul %87, %88, %cst_46 {dimension_numbers = #tpu.dot_dimension_numbers<[1], [0], [0], [1], [0, 0, 1, 1], [], []>} : vector<8x8xbf16>, vector<8x16xbf16>, vector<8x16xf32> -> vector<8x16xf32>
      %90 = arith.addf %86, %89 : vector<8x16xf32>
      %c1_47 = arith.constant 1 : index
      %c0_48 = arith.constant 0 : index
      %c0_49 = arith.constant 0 : index
      %91 = vector.load %arg9[%c1_47, %c0_48, %c0_49] : memref<2x8x16xf32, #tpu.memory_space<vmem>>, vector<1x8x16xf32>
      %92 = vector.shape_cast %91 : vector<1x8x16xf32> to vector<8x16xf32>
      %93 = vector.shape_cast %90 : vector<8x16xf32> to vector<1x8x16xf32>
      tpu.vector_store %arg9[%c1_47, %c0_48, %c0_49], %93 {strides = array<i32>} : memref<2x8x16xf32, #tpu.memory_space<vmem>>, vector<1x8x16xf32>,
      %c0_50 = arith.constant 0 : index
      %c1_51 = arith.constant 1 : index
      %94 = vector.load %arg7[%c0_50, %c1_51] : memref<8x2xf32, #tpu.memory_space<vmem>>, vector<8x1xf32>
      tpu.vector_store %arg7[%c0_50, %c1_51], %71 {strides = array<i32>} : memref<8x2xf32, #tpu.memory_space<vmem>>, vector<8x1xf32>,
    } else {
    }
    %c0_i32_4 = arith.constant 0 : i32
    %10 = arith.cmpi eq, %arg2, %c0_i32_4 : i32
    %11 = arith.extui %10 : i1 to i32
    %c0_i32_5 = arith.constant 0 : i32
    %12 = arith.cmpi ne, %11, %c0_i32_5 : i32
    scf.if %12 {
      %c0 = arith.constant 0 : index
      %c0_6 = arith.constant 0 : index
      %13 = vector.load %arg8[%c0, %c0_6] : memref<8x2xf32, #tpu.memory_space<vmem>>, vector<8x1xf32>
      %14 = tpu.reciprocal %13 {approx = true} : vector<8x1xf32> -> vector<8x1xf32>
      %c0_7 = arith.constant 0 : index
      %c0_8 = arith.constant 0 : index
      %c0_9 = arith.constant 0 : index
      %15 = vector.load %arg9[%c0_7, %c0_8, %c0_9] : memref<2x8x16xf32, #tpu.memory_space<vmem>>, vector<1x8x16xf32>
      %16 = vector.shape_cast %15 : vector<1x8x16xf32> to vector<8x16xf32>
      %17 = vector.broadcast %14 : vector<8x1xf32> to vector<8x16xf32>
      %18 = arith.mulf %16, %17 : vector<8x16xf32>
      %19 = arith.truncf %18 : vector<8x16xf32> to vector<8x16xbf16>
      %c0_10 = arith.constant 0 : index
      %c1 = arith.constant 1 : index
      %20 = vector.load %arg8[%c0_10, %c1] : memref<8x2xf32, #tpu.memory_space<vmem>>, vector<8x1xf32>
      %21 = tpu.reciprocal %20 {approx = true} : vector<8x1xf32> -> vector<8x1xf32>
      %c1_11 = arith.constant 1 : index
      %c0_12 = arith.constant 0 : index
      %c0_13 = arith.constant 0 : index
      %22 = vector.load %arg9[%c1_11, %c0_12, %c0_13] : memref<2x8x16xf32, #tpu.memory_space<vmem>>, vector<1x8x16xf32>
      %23 = vector.shape_cast %22 : vector<1x8x16xf32> to vector<8x16xf32>
      %24 = vector.broadcast %21 : vector<8x1xf32> to vector<8x16xf32>
      %25 = arith.mulf %23, %24 : vector<8x16xf32>
      %26 = arith.truncf %25 : vector<8x16xf32> to vector<8x16xbf16>
      %27 = tpu.concatenate %19, %26 in 1 : vector<8x16xbf16>, vector<8x16xbf16> -> vector<8x32xbf16>
      %c0_14 = arith.constant 0 : index
      %c0_15 = arith.constant 0 : index
      %c0_16 = arith.constant 0 : index
      %28 = vector.load %arg6[%c0_14, %c0_15, %c0_16] : memref<1x8x32xbf16, #tpu.memory_space<vmem>>, vector<1x8x32xbf16>
      %29 = vector.shape_cast %28 : vector<1x8x32xbf16> to vector<8x32xbf16>
      %30 = vector.shape_cast %27 : vector<8x32xbf16> to vector<1x8x32xbf16>
      tpu.vector_store %arg6[%c0_14, %c0_15, %c0_16], %30 {strides = array<i32>} : memref<1x8x32xbf16, #tpu.memory_space<vmem>>, vector<1x8x32xbf16>,
    } else {
    }
    return
  }
  func.func @transform_0(%arg0: i32, %arg1: i32, %arg2: i32) -> (i32, i32, i32) {
    %c0_i32 = arith.constant 0 : i32
    %c0_i32_0 = arith.constant 0 : i32
    return %arg0, %arg1, %c0_i32 : i32, i32, i32
  }
  func.func @transform_1(%arg0: i32, %arg1: i32, %arg2: i32) -> (i32, i32, i32) {
    %c0_i32 = arith.constant 0 : i32
    %c0_i32_0 = arith.constant 0 : i32
    return %arg0, %arg2, %c0_i32 : i32, i32, i32
  }
  func.func @transform_2(%arg0: i32, %arg1: i32, %arg2: i32) -> (i32, i32, i32) {
    %c0_i32 = arith.constant 0 : i32
    %c0_i32_0 = arith.constant 0 : i32
    return %arg0, %arg2, %c0_i32 : i32, i32, i32
  }
  func.func @transform_3(%arg0: i32, %arg1: i32, %arg2: i32) -> (i32, i32, i32) {
    %c0_i32 = arith.constant 0 : i32
    %c0_i32_0 = arith.constant 0 : i32
    return %arg0, %arg1, %c0_i32 : i32, i32, i32
  }
}

module attributes {stable_mosaic.version = 11 : i64} {
  func.func @_ln_qkv_kernel(%arg0: i32, %arg1: i32, %arg2: memref<16x32xbf16, #tpu.memory_space<vmem>>, %arg3: memref<1x32xf32, #tpu.memory_space<vmem>>, %arg4: memref<1x32xf32, #tpu.memory_space<vmem>>, %arg5: memref<32x32xbf16, #tpu.memory_space<vmem>>, %arg6: memref<32x32xbf16, #tpu.memory_space<vmem>>, %arg7: memref<32x32xbf16, #tpu.memory_space<vmem>>, %arg8: memref<1x32xf32, #tpu.memory_space<vmem>>, %arg9: memref<1x32xf32, #tpu.memory_space<vmem>>, %arg10: memref<1x32xf32, #tpu.memory_space<vmem>>, %arg11: memref<16x32xbf16, #tpu.memory_space<vmem>>, %arg12: memref<16x32xbf16, #tpu.memory_space<vmem>>, %arg13: memref<16x32xbf16, #tpu.memory_space<vmem>>, %arg14: memref<16x32xbf16, #tpu.memory_space<vmem>>) attributes {dimension_semantics = [#tpu.dimension_semantics<parallel>, #tpu.dimension_semantics<arbitrary>], iteration_bounds = array<i64: 1, 1>, scalar_prefetch = 0 : i64, scratch_operands = 1 : i64, tpu.core_type = #tpu.core_type<tc>, window_params = [{transform_indices = @transform_0, window_bounds = array<i64: 16, 32>}, {pipeline_mode = #tpu.pipeline_mode<synchronous>, transform_indices = @transform_1, window_bounds = array<i64: 1, 32>}, {pipeline_mode = #tpu.pipeline_mode<synchronous>, transform_indices = @transform_2, window_bounds = array<i64: 1, 32>}, {transform_indices = @transform_3, window_bounds = array<i64: 32, 32>}, {transform_indices = @transform_4, window_bounds = array<i64: 32, 32>}, {transform_indices = @transform_5, window_bounds = array<i64: 32, 32>}, {transform_indices = @transform_6, window_bounds = array<i64: 1, 32>}, {transform_indices = @transform_7, window_bounds = array<i64: 1, 32>}, {transform_indices = @transform_8, window_bounds = array<i64: 1, 32>}, {transform_indices = @transform_9, window_bounds = array<i64: 16, 32>}, {transform_indices = @transform_10, window_bounds = array<i64: 16, 32>}, {transform_indices = @transform_11, window_bounds = array<i64: 16, 32>}]} {
    %c0_i32 = arith.constant 0 : i32
    %0 = arith.cmpi eq, %arg1, %c0_i32 : i32
    %1 = arith.extui %0 : i1 to i32
    %c0_i32_0 = arith.constant 0 : i32
    %2 = arith.cmpi ne, %1, %c0_i32_0 : i32
    scf.if %2 {
      %c0_22 = arith.constant 0 : index
      %c0_23 = arith.constant 0 : index
      %25 = vector.load %arg2[%c0_22, %c0_23] : memref<16x32xbf16, #tpu.memory_space<vmem>>, vector<16x32xbf16>
      %26 = arith.extf %25 : vector<16x32xbf16> to vector<16x32xf32>
      %c0_24 = arith.constant 0 : index
      %c0_25 = arith.constant 0 : index
      %27 = vector.load %arg3[%c0_24, %c0_25] : memref<1x32xf32, #tpu.memory_space<vmem>>, vector<1x32xf32>
      %c0_26 = arith.constant 0 : index
      %c0_27 = arith.constant 0 : index
      %28 = vector.load %arg4[%c0_26, %c0_27] : memref<1x32xf32, #tpu.memory_space<vmem>>, vector<1x32xf32>
      %cst_28 = arith.constant dense<0.000000e+00> : vector<16xf32>
      %29 = vector.multi_reduction <add>, %26, %cst_28 [1] : vector<16x32xf32> to vector<16xf32>
      %30 = vector.shape_cast %29 : vector<16xf32> to vector<16x1xf32>
      %cst_29 = arith.constant 3.200000e+01 : f32
      %31 = vector.broadcast %cst_29 : f32 to vector<16x1xf32>
      %32 = arith.divf %30, %31 : vector<16x1xf32>
      %33 = vector.broadcast %32 : vector<16x1xf32> to vector<16x32xf32>
      %34 = arith.subf %26, %33 : vector<16x32xf32>
      %35 = arith.mulf %34, %34 : vector<16x32xf32>
      %cst_30 = arith.constant dense<0.000000e+00> : vector<16xf32>
      %36 = vector.multi_reduction <add>, %35, %cst_30 [1] : vector<16x32xf32> to vector<16xf32>
      %37 = vector.shape_cast %36 : vector<16xf32> to vector<16x1xf32>
      %cst_31 = arith.constant 3.200000e+01 : f32
      %38 = vector.broadcast %cst_31 : f32 to vector<16x1xf32>
      %39 = arith.divf %37, %38 : vector<16x1xf32>
      %40 = vector.broadcast %32 : vector<16x1xf32> to vector<16x32xf32>
      %41 = arith.subf %26, %40 : vector<16x32xf32>
      %cst_32 = arith.constant 9.99999974E-6 : f32
      %42 = vector.broadcast %cst_32 : f32 to vector<16x1xf32>
      %43 = arith.addf %39, %42 : vector<16x1xf32>
      %44 = math.rsqrt %43 : vector<16x1xf32>
      %45 = vector.broadcast %44 : vector<16x1xf32> to vector<16x32xf32>
      %46 = arith.mulf %41, %45 : vector<16x32xf32>
      %47 = vector.broadcast %27 : vector<1x32xf32> to vector<16x32xf32>
      %48 = arith.mulf %46, %47 : vector<16x32xf32>
      %49 = vector.broadcast %28 : vector<1x32xf32> to vector<16x32xf32>
      %50 = arith.addf %48, %49 : vector<16x32xf32>
      %51 = arith.truncf %50 : vector<16x32xf32> to vector<16x32xbf16>
      %c0_33 = arith.constant 0 : index
      %c0_34 = arith.constant 0 : index
      %52 = vector.load %arg14[%c0_33, %c0_34] : memref<16x32xbf16, #tpu.memory_space<vmem>>, vector<16x32xbf16>
      tpu.vector_store %arg14[%c0_33, %c0_34], %51 {strides = array<i32>} : memref<16x32xbf16, #tpu.memory_space<vmem>>, vector<16x32xbf16>,
    } else {
    }
    %c0 = arith.constant 0 : index
    %c0_1 = arith.constant 0 : index
    %3 = vector.load %arg14[%c0, %c0_1] : memref<16x32xbf16, #tpu.memory_space<vmem>>, vector<16x32xbf16>
    %c0_2 = arith.constant 0 : index
    %c0_3 = arith.constant 0 : index
    %4 = vector.load %arg5[%c0_2, %c0_3] : memref<32x32xbf16, #tpu.memory_space<vmem>>, vector<32x32xbf16>
    %cst = arith.constant dense<0.000000e+00> : vector<16x32xf32>
    %5 = tpu.matmul %3, %4, %cst {dimension_numbers = #tpu.dot_dimension_numbers<[1], [0], [0], [1], [0, 0, 1, 1], [], []>} : vector<16x32xbf16>, vector<32x32xbf16>, vector<16x32xf32> -> vector<16x32xf32>
    %c0_4 = arith.constant 0 : index
    %c0_5 = arith.constant 0 : index
    %6 = vector.load %arg8[%c0_4, %c0_5] : memref<1x32xf32, #tpu.memory_space<vmem>>, vector<1x32xf32>
    %7 = vector.broadcast %6 : vector<1x32xf32> to vector<16x32xf32>
    %8 = arith.addf %5, %7 : vector<16x32xf32>
    %9 = arith.truncf %8 : vector<16x32xf32> to vector<16x32xbf16>
    %c0_6 = arith.constant 0 : index
    %c0_7 = arith.constant 0 : index
    %10 = vector.load %arg11[%c0_6, %c0_7] : memref<16x32xbf16, #tpu.memory_space<vmem>>, vector<16x32xbf16>
    tpu.vector_store %arg11[%c0_6, %c0_7], %9 {strides = array<i32>} : memref<16x32xbf16, #tpu.memory_space<vmem>>, vector<16x32xbf16>,
    %c0_8 = arith.constant 0 : index
    %c0_9 = arith.constant 0 : index
    %11 = vector.load %arg6[%c0_8, %c0_9] : memref<32x32xbf16, #tpu.memory_space<vmem>>, vector<32x32xbf16>
    %cst_10 = arith.constant dense<0.000000e+00> : vector<16x32xf32>
    %12 = tpu.matmul %3, %11, %cst_10 {dimension_numbers = #tpu.dot_dimension_numbers<[1], [0], [0], [1], [0, 0, 1, 1], [], []>} : vector<16x32xbf16>, vector<32x32xbf16>, vector<16x32xf32> -> vector<16x32xf32>
    %c0_11 = arith.constant 0 : index
    %c0_12 = arith.constant 0 : index
    %13 = vector.load %arg9[%c0_11, %c0_12] : memref<1x32xf32, #tpu.memory_space<vmem>>, vector<1x32xf32>
    %14 = vector.broadcast %13 : vector<1x32xf32> to vector<16x32xf32>
    %15 = arith.addf %12, %14 : vector<16x32xf32>
    %16 = arith.truncf %15 : vector<16x32xf32> to vector<16x32xbf16>
    %c0_13 = arith.constant 0 : index
    %c0_14 = arith.constant 0 : index
    %17 = vector.load %arg12[%c0_13, %c0_14] : memref<16x32xbf16, #tpu.memory_space<vmem>>, vector<16x32xbf16>
    tpu.vector_store %arg12[%c0_13, %c0_14], %16 {strides = array<i32>} : memref<16x32xbf16, #tpu.memory_space<vmem>>, vector<16x32xbf16>,
    %c0_15 = arith.constant 0 : index
    %c0_16 = arith.constant 0 : index
    %18 = vector.load %arg7[%c0_15, %c0_16] : memref<32x32xbf16, #tpu.memory_space<vmem>>, vector<32x32xbf16>
    %cst_17 = arith.constant dense<0.000000e+00> : vector<16x32xf32>
    %19 = tpu.matmul %3, %18, %cst_17 {dimension_numbers = #tpu.dot_dimension_numbers<[1], [0], [0], [1], [0, 0, 1, 1], [], []>} : vector<16x32xbf16>, vector<32x32xbf16>, vector<16x32xf32> -> vector<16x32xf32>
    %c0_18 = arith.constant 0 : index
    %c0_19 = arith.constant 0 : index
    %20 = vector.load %arg10[%c0_18, %c0_19] : memref<1x32xf32, #tpu.memory_space<vmem>>, vector<1x32xf32>
    %21 = vector.broadcast %20 : vector<1x32xf32> to vector<16x32xf32>
    %22 = arith.addf %19, %21 : vector<16x32xf32>
    %23 = arith.truncf %22 : vector<16x32xf32> to vector<16x32xbf16>
    %c0_20 = arith.constant 0 : index
    %c0_21 = arith.constant 0 : index
    %24 = vector.load %arg13[%c0_20, %c0_21] : memref<16x32xbf16, #tpu.memory_space<vmem>>, vector<16x32xbf16>
    tpu.vector_store %arg13[%c0_20, %c0_21], %23 {strides = array<i32>} : memref<16x32xbf16, #tpu.memory_space<vmem>>, vector<16x32xbf16>,
    return
  }
  func.func @transform_0(%arg0: i32, %arg1: i32) -> (i32, i32) {
    %c0_i32 = arith.constant 0 : i32
    %c0_i32_0 = arith.constant 0 : i32
    return %arg0, %c0_i32 : i32, i32
  }
  func.func @transform_1(%arg0: i32, %arg1: i32) -> (i32, i32) {
    %c0_i32 = arith.constant 0 : i32
    %c0_i32_0 = arith.constant 0 : i32
    %c0_i32_1 = arith.constant 0 : i32
    return %c0_i32, %c0_i32_0 : i32, i32
  }
  func.func @transform_2(%arg0: i32, %arg1: i32) -> (i32, i32) {
    %c0_i32 = arith.constant 0 : i32
    %c0_i32_0 = arith.constant 0 : i32
    %c0_i32_1 = arith.constant 0 : i32
    return %c0_i32, %c0_i32_0 : i32, i32
  }
  func.func @transform_3(%arg0: i32, %arg1: i32) -> (i32, i32) {
    %c0_i32 = arith.constant 0 : i32
    %c0_i32_0 = arith.constant 0 : i32
    return %c0_i32, %arg1 : i32, i32
  }
  func.func @transform_4(%arg0: i32, %arg1: i32) -> (i32, i32) {
    %c0_i32 = arith.constant 0 : i32
    %c0_i32_0 = arith.constant 0 : i32
    return %c0_i32, %arg1 : i32, i32
  }
  func.func @transform_5(%arg0: i32, %arg1: i32) -> (i32, i32) {
    %c0_i32 = arith.constant 0 : i32
    %c0_i32_0 = arith.constant 0 : i32
    return %c0_i32, %arg1 : i32, i32
  }
  func.func @transform_6(%arg0: i32, %arg1: i32) -> (i32, i32) {
    %c0_i32 = arith.constant 0 : i32
    %c0_i32_0 = arith.constant 0 : i32
    return %c0_i32, %arg1 : i32, i32
  }
  func.func @transform_7(%arg0: i32, %arg1: i32) -> (i32, i32) {
    %c0_i32 = arith.constant 0 : i32
    %c0_i32_0 = arith.constant 0 : i32
    return %c0_i32, %arg1 : i32, i32
  }
  func.func @transform_8(%arg0: i32, %arg1: i32) -> (i32, i32) {
    %c0_i32 = arith.constant 0 : i32
    %c0_i32_0 = arith.constant 0 : i32
    return %c0_i32, %arg1 : i32, i32
  }
  func.func @transform_9(%arg0: i32, %arg1: i32) -> (i32, i32) {
    %c0_i32 = arith.constant 0 : i32
    return %arg0, %arg1 : i32, i32
  }
  func.func @transform_10(%arg0: i32, %arg1: i32) -> (i32, i32) {
    %c0_i32 = arith.constant 0 : i32
    return %arg0, %arg1 : i32, i32
  }
  func.func @transform_11(%arg0: i32, %arg1: i32) -> (i32, i32) {
    %c0_i32 = arith.constant 0 : i32
    return %arg0, %arg1 : i32, i32
  }
}

module attributes {stable_mosaic.version = 11 : i64} {
  func.func @_ln_head_kernel(%arg0: i32, %arg1: i32, %arg2: memref<16x32xbf16, #tpu.memory_space<vmem>>, %arg3: memref<1x32xf32, #tpu.memory_space<vmem>>, %arg4: memref<1x32xf32, #tpu.memory_space<vmem>>, %arg5: memref<16x16xbf16, #tpu.memory_space<vmem>>, %arg6: memref<1x16xf32, #tpu.memory_space<vmem>>, %arg7: memref<16x2x16xf32, #tpu.memory_space<vmem>>, %arg8: memref<16x32xbf16, #tpu.memory_space<vmem>>) attributes {dimension_semantics = [#tpu.dimension_semantics<parallel>, #tpu.dimension_semantics<arbitrary>], iteration_bounds = array<i64: 1, 1>, scalar_prefetch = 0 : i64, scratch_operands = 1 : i64, tpu.core_type = #tpu.core_type<tc>, window_params = [{transform_indices = @transform_0, window_bounds = array<i64: 16, 32>}, {pipeline_mode = #tpu.pipeline_mode<synchronous>, transform_indices = @transform_1, window_bounds = array<i64: 1, 32>}, {pipeline_mode = #tpu.pipeline_mode<synchronous>, transform_indices = @transform_2, window_bounds = array<i64: 1, 32>}, {transform_indices = @transform_3, window_bounds = array<i64: 16, 16>}, {transform_indices = @transform_4, window_bounds = array<i64: 1, 16>}, {transform_indices = @transform_5, window_bounds = array<i64: 16, 2, 16>}]} {
    %c0_i32 = arith.constant 0 : i32
    %0 = arith.cmpi eq, %arg1, %c0_i32 : i32
    %1 = arith.extui %0 : i1 to i32
    %c0_i32_0 = arith.constant 0 : i32
    %2 = arith.cmpi ne, %1, %c0_i32_0 : i32
    scf.if %2 {
      %c0_13 = arith.constant 0 : index
      %c0_14 = arith.constant 0 : index
      %19 = vector.load %arg2[%c0_13, %c0_14] : memref<16x32xbf16, #tpu.memory_space<vmem>>, vector<16x32xbf16>
      %20 = arith.extf %19 : vector<16x32xbf16> to vector<16x32xf32>
      %c0_15 = arith.constant 0 : index
      %c0_16 = arith.constant 0 : index
      %21 = vector.load %arg3[%c0_15, %c0_16] : memref<1x32xf32, #tpu.memory_space<vmem>>, vector<1x32xf32>
      %c0_17 = arith.constant 0 : index
      %c0_18 = arith.constant 0 : index
      %22 = vector.load %arg4[%c0_17, %c0_18] : memref<1x32xf32, #tpu.memory_space<vmem>>, vector<1x32xf32>
      %cst_19 = arith.constant dense<0.000000e+00> : vector<16xf32>
      %23 = vector.multi_reduction <add>, %20, %cst_19 [1] : vector<16x32xf32> to vector<16xf32>
      %24 = vector.shape_cast %23 : vector<16xf32> to vector<16x1xf32>
      %cst_20 = arith.constant 3.200000e+01 : f32
      %25 = vector.broadcast %cst_20 : f32 to vector<16x1xf32>
      %26 = arith.divf %24, %25 : vector<16x1xf32>
      %27 = vector.broadcast %26 : vector<16x1xf32> to vector<16x32xf32>
      %28 = arith.subf %20, %27 : vector<16x32xf32>
      %29 = arith.mulf %28, %28 : vector<16x32xf32>
      %cst_21 = arith.constant dense<0.000000e+00> : vector<16xf32>
      %30 = vector.multi_reduction <add>, %29, %cst_21 [1] : vector<16x32xf32> to vector<16xf32>
      %31 = vector.shape_cast %30 : vector<16xf32> to vector<16x1xf32>
      %cst_22 = arith.constant 3.200000e+01 : f32
      %32 = vector.broadcast %cst_22 : f32 to vector<16x1xf32>
      %33 = arith.divf %31, %32 : vector<16x1xf32>
      %34 = vector.broadcast %26 : vector<16x1xf32> to vector<16x32xf32>
      %35 = arith.subf %20, %34 : vector<16x32xf32>
      %cst_23 = arith.constant 9.99999974E-6 : f32
      %36 = vector.broadcast %cst_23 : f32 to vector<16x1xf32>
      %37 = arith.addf %33, %36 : vector<16x1xf32>
      %38 = math.rsqrt %37 : vector<16x1xf32>
      %39 = vector.broadcast %38 : vector<16x1xf32> to vector<16x32xf32>
      %40 = arith.mulf %35, %39 : vector<16x32xf32>
      %41 = vector.broadcast %21 : vector<1x32xf32> to vector<16x32xf32>
      %42 = arith.mulf %40, %41 : vector<16x32xf32>
      %43 = vector.broadcast %22 : vector<1x32xf32> to vector<16x32xf32>
      %44 = arith.addf %42, %43 : vector<16x32xf32>
      %45 = arith.truncf %44 : vector<16x32xf32> to vector<16x32xbf16>
      %c0_24 = arith.constant 0 : index
      %c0_25 = arith.constant 0 : index
      %46 = vector.load %arg8[%c0_24, %c0_25] : memref<16x32xbf16, #tpu.memory_space<vmem>>, vector<16x32xbf16>
      tpu.vector_store %arg8[%c0_24, %c0_25], %45 {strides = array<i32>} : memref<16x32xbf16, #tpu.memory_space<vmem>>, vector<16x32xbf16>,
    } else {
    }
    %c0 = arith.constant 0 : index
    %c0_1 = arith.constant 0 : index
    %3 = vector.load %arg5[%c0, %c0_1] : memref<16x16xbf16, #tpu.memory_space<vmem>>, vector<16x16xbf16>
    %c0_2 = arith.constant 0 : index
    %c0_3 = arith.constant 0 : index
    %4 = vector.load %arg6[%c0_2, %c0_3] : memref<1x16xf32, #tpu.memory_space<vmem>>, vector<1x16xf32>
    %c0_4 = arith.constant 0 : index
    %c0_5 = arith.constant 0 : index
    %5 = vector.load %arg8[%c0_4, %c0_5] : memref<16x32xbf16, #tpu.memory_space<vmem>>, vector<16x16xbf16>
    %cst = arith.constant dense<0.000000e+00> : vector<16x16xf32>
    %6 = tpu.matmul %5, %3, %cst {dimension_numbers = #tpu.dot_dimension_numbers<[1], [0], [0], [1], [0, 0, 1, 1], [], []>} : vector<16x16xbf16>, vector<16x16xbf16>, vector<16x16xf32> -> vector<16x16xf32>
    %7 = vector.broadcast %4 : vector<1x16xf32> to vector<16x16xf32>
    %8 = arith.addf %6, %7 : vector<16x16xf32>
    %c0_6 = arith.constant 0 : index
    %c0_7 = arith.constant 0 : index
    %c0_8 = arith.constant 0 : index
    %9 = vector.load %arg7[%c0_6, %c0_7, %c0_8] : memref<16x2x16xf32, #tpu.memory_space<vmem>>, vector<16x1x16xf32>
    %10 = vector.shape_cast %9 : vector<16x1x16xf32> to vector<16x16xf32>
    %11 = vector.shape_cast %8 : vector<16x16xf32> to vector<16x1x16xf32>
    tpu.vector_store %arg7[%c0_6, %c0_7, %c0_8], %11 {strides = array<i32>} : memref<16x2x16xf32, #tpu.memory_space<vmem>>, vector<16x1x16xf32>,
    %c0_9 = arith.constant 0 : index
    %c16 = arith.constant 16 : index
    %12 = vector.load %arg8[%c0_9, %c16] : memref<16x32xbf16, #tpu.memory_space<vmem>>, vector<16x16xbf16>
    %cst_10 = arith.constant dense<0.000000e+00> : vector<16x16xf32>
    %13 = tpu.matmul %12, %3, %cst_10 {dimension_numbers = #tpu.dot_dimension_numbers<[1], [0], [0], [1], [0, 0, 1, 1], [], []>} : vector<16x16xbf16>, vector<16x16xbf16>, vector<16x16xf32> -> vector<16x16xf32>
    %14 = vector.broadcast %4 : vector<1x16xf32> to vector<16x16xf32>
    %15 = arith.addf %13, %14 : vector<16x16xf32>
    %c0_11 = arith.constant 0 : index
    %c1 = arith.constant 1 : index
    %c0_12 = arith.constant 0 : index
    %16 = vector.load %arg7[%c0_11, %c1, %c0_12] : memref<16x2x16xf32, #tpu.memory_space<vmem>>, vector<16x1x16xf32>
    %17 = vector.shape_cast %16 : vector<16x1x16xf32> to vector<16x16xf32>
    %18 = vector.shape_cast %15 : vector<16x16xf32> to vector<16x1x16xf32>
    tpu.vector_store %arg7[%c0_11, %c1, %c0_12], %18 {strides = array<i32>} : memref<16x2x16xf32, #tpu.memory_space<vmem>>, vector<16x1x16xf32>,
    return
  }
  func.func @transform_0(%arg0: i32, %arg1: i32) -> (i32, i32) {
    %c0_i32 = arith.constant 0 : i32
    %c0_i32_0 = arith.constant 0 : i32
    return %arg0, %c0_i32 : i32, i32
  }
  func.func @transform_1(%arg0: i32, %arg1: i32) -> (i32, i32) {
    %c0_i32 = arith.constant 0 : i32
    %c0_i32_0 = arith.constant 0 : i32
    %c0_i32_1 = arith.constant 0 : i32
    return %c0_i32, %c0_i32_0 : i32, i32
  }
  func.func @transform_2(%arg0: i32, %arg1: i32) -> (i32, i32) {
    %c0_i32 = arith.constant 0 : i32
    %c0_i32_0 = arith.constant 0 : i32
    %c0_i32_1 = arith.constant 0 : i32
    return %c0_i32, %c0_i32_0 : i32, i32
  }
  func.func @transform_3(%arg0: i32, %arg1: i32) -> (i32, i32) {
    %c0_i32 = arith.constant 0 : i32
    %c0_i32_0 = arith.constant 0 : i32
    return %c0_i32, %arg1 : i32, i32
  }
  func.func @transform_4(%arg0: i32, %arg1: i32) -> (i32, i32) {
    %c0_i32 = arith.constant 0 : i32
    %c0_i32_0 = arith.constant 0 : i32
    return %c0_i32, %arg1 : i32, i32
  }
  func.func @transform_5(%arg0: i32, %arg1: i32) -> (i32, i32, i32) {
    %c0_i32 = arith.constant 0 : i32
    %c0_i32_0 = arith.constant 0 : i32
    return %arg0, %c0_i32, %arg1 : i32, i32, i32
  }
}

</mosaic_0001>

<llo_original>
// kernel: _lambda_.11
$region0: #{_lambda_.11}
  #allocation0 [shape = 'u32[]', space=smem, size = 0x4, offset = 0x4, fixed_abs, tag = 'smem constant byte address 0x4 - core index']
  #allocation1 [shape = 'u32[72,128]{1,0:T(1,128)}', space=vmem, size = 0x9000, scoped, tag = 'internal scratch']
  %s0 = inlined_call_operand.vmem [shape: bf16[16,32], index: 0, kind: input, shape index: {}]
  %s1 = inlined_call_operand.vmem [shape: bf16[32,32], index: 1, kind: input, shape index: {}]
  %s2 = inlined_call_operand.vmem [shape: f32[1,32], index: 2, kind: input, shape index: {}]
  %s3 = inlined_call_operand.vmem [shape: bf16[16,32], index: 3, kind: input, shape index: {}]
  %s4 = inlined_call_operand.vmem [shape: bf16[16,32], index: 4, kind: output, shape index: {}]
  %s5 = sld [smem:[#allocation0]]
  $region26: #{_lambda_.11} parent=0
    _
  %s7 = ssub.s32 1, %s5
  %s8 = scalar_select 0, %s7, %s5
  // Predicated region
  $region2: #{_lambda_.11} parent=0 // pred_check
    _
  $region3: #{_lambda_.11} parent=0 // pred_check_branch
    %10 = sbr.rel (0) target = $region5
  $region4: #{_lambda_.11} parent=0 // pred_region
    _
  $region5: #{_lambda_.11} parent=0 // pred_fallthru
    _
  // Predicated region
  $region6: #{_lambda_.11} parent=0 // pred_check
    _
  $region7: #{_lambda_.11} parent=0 // pred_check_branch
    %12 = sbr.rel (0) target = $region9
  $region8: #{_lambda_.11} parent=0 // pred_region
    _
  $region9: #{_lambda_.11} parent=0 // pred_fallthru
    _
  // Predicated region
  $region10: #{_lambda_.11} parent=0 // pred_check
    _
  $region11: #{_lambda_.11} parent=0 // pred_check_branch
    %14 = sbr.rel (0) target = $region13
  $region12: #{_lambda_.11} parent=0 // pred_region
    _
  $region13: #{_lambda_.11} parent=0 // pred_fallthru
    _
  // Predicated region
  $region14: #{_lambda_.11} parent=0 // pred_check
    _
  $region15: #{_lambda_.11} parent=0 // pred_check_branch
    %16 = sbr.rel (0) target = $region17
  $region16: #{_lambda_.11} parent=0 // pred_region
    _
  $region17: #{_lambda_.11} parent=0 // pred_fallthru
    _
  %v18 = vld [vmem:[%s0] sm:$0xf]
  %v19 = vld [vmem:[%s0 + $0x4] sm:$0xf]
  %v20 = vld [vmem:[%s1] sm:$0xf]
  %v21 = vld [vmem:[%s1 + $0x4] sm:$0xf]
  %v22 = vld [vmem:[%s1 + $0x8] sm:$0xf]
  %v23 = vld [vmem:[%s1 + $0xc] sm:$0xf]
  %v24 = vld [vmem:[%s2] sm:$0x1]
  %v26 = vperm.slane %v24, 0
  %v30 = vunpack.c.l.b16 %v18
  %v31 = vunpack.c.l.b16 %v19
  %v32 = vpack.c.b16 %v31, %v30
  %v37 = vunpack.c.l.b16 %v20
  %v38 = vunpack.c.l.b16 %v21
  %v39 = vunpack.c.l.b16 %v22
  %v40 = vunpack.c.l.b16 %v23
  %v41 = vpack.c.b16 %v38, %v37
  %v42 = vpack.c.b16 %v40, %v39
  %vm45 = vcmask 261120
  %v47 = vsel %vm45, %v32, 0
  %49 = vmatpush.bf16.msra.mxu0 0
  %50 = vmatpush.bf16.msra.mxu0 0
  %51 = vmatpush.bf16.msra.mxu0 0
  %52 = vmatpush.bf16.msra.mxu0 0
  %53 = vmatpush.bf16.msra.mxu0 0
  %54 = vmatpush.bf16.msra.mxu0 0
  %55 = vmatpush.bf16.msra.mxu0 %v42
  %56 = vmatpush.bf16.msra.mxu0 %v41
  %57 = vmatmul.bf16.gmra.mxu0 %v47
  %v58 = vpop.f32.mrf.mxu0
  %v59 = vadd.f32 %v26, %v58
  %v60 = vpop.f32.mrf.mxu0
  %v61 = vadd.f32 %v26, %v60
  %62 = vdwg.mxu0
  %v63 = vld [vmem:[%s3] sm:$0xf]
  %v64 = vld [vmem:[%s3 + $0x4] sm:$0xf]
  %v65 = vunpack.c.l.bf16 %v63
  %v66 = vunpack.c.l.bf16 %v64
  %v67 = vadd.f32 %v59, %v65
  %v68 = vadd.f32 %v61, %v66
  %v69 = vpack.c.bf16 %v67, %v67
  %v70 = vpack.c.bf16 %v68, %v68
  %vm71 = vcmask 257024
  %72 = vst.msk [vmem:[%s4] sm:$0xf] %vm71, %v69
  %73 = vst.msk [vmem:[%s4 + $0x4] sm:$0xf] %vm71, %v70
  // Predicated region
  $region18: #{_lambda_.11} parent=0 // pred_check
    _
  $region19: #{_lambda_.11} parent=0 // pred_check_branch
    %75 = sbr.rel (0) target = $region21
  $region20: #{_lambda_.11} parent=0 // pred_region
    _
  $region21: #{_lambda_.11} parent=0 // pred_fallthru
    _
  // Predicated region
  $region22: #{_lambda_.11} parent=0 // pred_check
    _
  $region23: #{_lambda_.11} parent=0 // pred_check_branch
    %77 = sbr.rel (0) target = $region25
  $region24: #{_lambda_.11} parent=0 // pred_region
    _
  $region25: #{_lambda_.11} parent=0 // pred_fallthru
    _

// kernel: _lambda_.12
$region0: #{_lambda_.12}
  #allocation0 [shape = 'u32[]', space=smem, size = 0x4, offset = 0x4, fixed_abs, tag = 'smem constant byte address 0x4 - core index']
  #allocation1 [shape = 'u32[72,128]{1,0:T(1,128)}', space=vmem, size = 0x9000, scoped, tag = 'internal scratch']
  #allocation2 [shape = 'bf16[16,32]{1,0:T(8,128)(2,1)}', space=vmem, size = 0x1000, scoped, tag = 'scratch operand']
  #allocation3 [shape = 'f32[16,32]{1,0:T(8,128)}', space=vmem, size = 0x2000, scoped, tag = 'scratch operand']
  %s0 = inlined_call_operand.vmem [shape: bf16[16,32], index: 0, kind: input, shape index: {}]
  %s1 = inlined_call_operand.vmem [shape: f32[1,32], index: 1, kind: input, shape index: {}]
  %s2 = inlined_call_operand.vmem [shape: f32[1,32], index: 2, kind: input, shape index: {}]
  %s3 = inlined_call_operand.vmem [shape: bf16[32,64], index: 3, kind: input, shape index: {}]
  %s4 = inlined_call_operand.vmem [shape: f32[1,64], index: 4, kind: input, shape index: {}]
  %s5 = inlined_call_operand.vmem [shape: bf16[64,32], index: 5, kind: input, shape index: {}]
  %s6 = inlined_call_operand.vmem [shape: f32[1,32], index: 6, kind: input, shape index: {}]
  %s7 = inlined_call_operand.vmem [shape: bf16[16,32], index: 7, kind: output, shape index: {}]
  %s8 = sld [smem:[#allocation0]]
  $region46: #{_lambda_.12} parent=0
    _
  %s10 = ssub.s32 1, %s8
  %s11 = scalar_select 0, %s10, %s8
  // Predicated region
  $region2: #{_lambda_.12} parent=0 // pred_check
    _
  $region3: #{_lambda_.12} parent=0 // pred_check_branch
    %13 = sbr.rel (0) target = $region5
  $region4: #{_lambda_.12} parent=0 // pred_region
    _
  $region5: #{_lambda_.12} parent=0 // pred_fallthru
    _
  // Predicated region
  $region6: #{_lambda_.12} parent=0 // pred_check
    _
  $region7: #{_lambda_.12} parent=0 // pred_check_branch
    %15 = sbr.rel (0) target = $region9
  $region8: #{_lambda_.12} parent=0 // pred_region
    _
  $region9: #{_lambda_.12} parent=0 // pred_fallthru
    _
  // Predicated region
  $region10: #{_lambda_.12} parent=0 // pred_check
    _
  $region11: #{_lambda_.12} parent=0 // pred_check_branch
    %17 = sbr.rel (0) target = $region13
  $region12: #{_lambda_.12} parent=0 // pred_region
    _
  $region13: #{_lambda_.12} parent=0 // pred_fallthru
    _
  // Predicated region
  $region14: #{_lambda_.12} parent=0 // pred_check
    _
  $region15: #{_lambda_.12} parent=0 // pred_check_branch
    %19 = sbr.rel (0) target = $region17
  $region16: #{_lambda_.12} parent=0 // pred_region
    _
  $region17: #{_lambda_.12} parent=0 // pred_fallthru
    _
  // Predicated region
  $region18: #{_lambda_.12} parent=0 // pred_check
    _
  $region19: #{_lambda_.12} parent=0 // pred_check_branch
    %21 = sbr.rel (0) target = $region21
  $region20: #{_lambda_.12} parent=0 // pred_region
    _
  $region21: #{_lambda_.12} parent=0 // pred_fallthru
    _
  // Predicated region
  $region22: #{_lambda_.12} parent=0 // pred_check
    _
  $region23: #{_lambda_.12} parent=0 // pred_check_branch
    %23 = sbr.rel (0) target = $region25
  $region24: #{_lambda_.12} parent=0 // pred_region
    _
  $region25: #{_lambda_.12} parent=0 // pred_fallthru
    _
  // Predicated region
  $region26: #{_lambda_.12} parent=0 // pred_check
    _
  $region27: #{_lambda_.12} parent=0 // pred_check_branch
    %25 = sbr.rel (0) target = $region29
  $region28: #{_lambda_.12} parent=0 // pred_region
    _
  $region29: #{_lambda_.12} parent=0 // pred_fallthru
    _
  %p27 = scmp.eq.s32.totalorder 0, 0
  // Predicated region
  $region30: #{_lambda_.12} parent=0 // pred_check
    %p28 = pneg %p27
  $region31: #{_lambda_.12} parent=0 // pred_check_branch
    %30 = sbr.rel (%p28) target = $region33
  $region32: #{_lambda_.12} parent=0 // pred_region
    %v31 = vld [vmem:[%s0] sm:$0xf]
    %v32 = vld [vmem:[%s0 + $0x4] sm:$0xf]
    %v33 = vunpack.c.l.bf16 %v31
    %v34 = vunpack.c.l.bf16 %v32
    %v35 = vld [vmem:[%s1] sm:$0x1]
    %v36 = vld [vmem:[%s2] sm:$0x1]
    %vm37 = vcmask 261120
    %v38 = vsel %vm37, %v33, 0.0
    %39 = vadd.xlane.f32.xlu0 %v38
    %v40 = vpop.xlane.xlu0 %39
    %v41 = vsel %vm37, %v34, 0.0
    %42 = vadd.xlane.f32.xlu0 %v41
    %v43 = vpop.xlane.xlu0 %42
    %v44 = vrcp.pop 32.0
    %v45 = vmul.f32 32.0, %v44
    %v46 = vsub.f32 1.0, %v45
    %v47 = vmul.f32 %v44, %v46
    %v48 = vadd.f32 %v44, %v47
    %vm49 = vweird.f32 %v44
    %v50 = vsel %vm49, %v44, %v48
    %v51 = vmul.f32 %v40, %v50
    %v52 = vmul.f32 %v43, %v50
    %v53 = vsub.f32 %v33, %v51
    %v54 = vsub.f32 %v34, %v52
    %v55 = vmul.f32 %v53, %v53
    %v56 = vmul.f32 %v54, %v54
    %v57 = vsel %vm37, %v55, 0.0
    %58 = vadd.xlane.f32.xlu0 %v57
    %v59 = vpop.xlane.xlu0 %58
    %v60 = vsel %vm37, %v56, 0.0
    %61 = vadd.xlane.f32.xlu0 %v60
    %v62 = vpop.xlane.xlu0 %61
    %v63 = vmul.f32 %v59, %v50
    %v64 = vmul.f32 %v62, %v50
    %v65 = vadd.f32 %v63, 1e-05
    %v66 = vadd.f32 %v64, 1e-05
    %v67 = vrsqrt.pop %v65
    %v68 = vmul.f32 %v67, %v65
    %v69 = vmul.f32 %v68, %v67
    %v70 = vmul.f32 0.5, %v69
    %v71 = vsub.f32 1.5, %v70
    %v72 = vmul.f32 %v67, %v71
    %vm73 = vweird.f32 %v65
    %vm74 = vweird.f32 %v67
    %vm75 = vmor %vm73, %vm74
    %v76 = vsel %vm75, %v67, %v72
    %v77 = vrsqrt.pop %v66
    %v78 = vmul.f32 %v77, %v66
    %v79 = vmul.f32 %v78, %v77
    %v80 = vmul.f32 0.5, %v79
    %v81 = vsub.f32 1.5, %v80
    %v82 = vmul.f32 %v77, %v81
    %vm83 = vweird.f32 %v66
    %vm84 = vweird.f32 %v77
    %vm85 = vmor %vm83, %vm84
    %v86 = vsel %vm85, %v77, %v82
    %v87 = vmul.f32 %v53, %v76
    %v88 = vmul.f32 %v54, %v86
    %v90 = vperm.slane %v35, 0
    %v92 = vmul.f32 %v87, %v90
    %v93 = vmul.f32 %v88, %v90
    %v95 = vperm.slane %v36, 0
    %v97 = vadd.f32 %v92, %v95
    %v98 = vadd.f32 %v93, %v95
    %v99 = vpack.c.bf16 %v97, %v97
    %v100 = vpack.c.bf16 %v98, %v98
    %vm101 = vcmask 257024
    %102 = vst.msk [vmem:[#allocation2] sm:$0xf] %vm101, %v99
    %103 = vst.msk [vmem:[#allocation2 + $0x4] sm:$0xf] %vm101, %v100
    %v104 = vld [vmem:[%s6] sm:$0x1]
    %v106 = vperm.slane %v104, 0
    %v108 = vadd.f32 %v33, %v106
    %v109 = vadd.f32 %v34, %v106
    %110 = vst.msk [vmem:[#allocation3] sm:$0xff] %vm37, %v108
    %111 = vst.msk [vmem:[#allocation3 + $0x8] sm:$0xff] %vm37, %v109
  $region33: #{_lambda_.12} parent=0 // pred_fallthru
    _
  %v112 = vld [vmem:[#allocation2] sm:$0xf]
  %v113 = vld [vmem:[#allocation2 + $0x4] sm:$0xf]
  %v114 = vld [vmem:[%s3] sm:$0xf]
  %v115 = vld [vmem:[%s3 + $0x4] sm:$0xf]
  %v116 = vld [vmem:[%s3 + $0x8] sm:$0xf]
  %v117 = vld [vmem:[%s3 + $0xc] sm:$0xf]
  %v118 = vld [vmem:[%s4] sm:$0x1]
  %v120 = vperm.slane %v118, 0
  %v124 = vunpack.c.l.b16 %v112
  %v125 = vunpack.c.l.b16 %v113
  %v126 = vpack.c.b16 %v125, %v124
  %v131 = vunpack.c.l.b16 %v114
  %v132 = vunpack.c.l.b16 %v115
  %v133 = vunpack.c.l.b16 %v116
  %v134 = vunpack.c.l.b16 %v117
  %v135 = vpack.c.b16 %v132, %v131
  %v136 = vpack.c.b16 %v134, %v133
  %vm139 = vcmask 261120
  %v141 = vsel %vm139, %v126, 0
  %143 = vmatpush.bf16.msra.mxu0 0
  %144 = vmatpush.bf16.msra.mxu0 0
  %145 = vmatpush.bf16.msra.mxu0 0
  %146 = vmatpush.bf16.msra.mxu0 0
  %147 = vmatpush.bf16.msra.mxu0 0
  %148 = vmatpush.bf16.msra.mxu0 0
  %149 = vmatpush.bf16.msra.mxu0 %v136
  %150 = vmatpush.bf16.msra.mxu0 %v135
  %151 = vmatmul.bf16.gmra.mxu0 %v141
  %v152 = vpop.f32.mrf.mxu0
  %v153 = vadd.f32 %v120, %v152
  %v154 = vpop.f32.mrf.mxu0
  %v155 = vadd.f32 %v120, %v154
  %156 = vdwg.mxu0
  %v157 = vxor.u32 %v153, 2147483648
  %v158 = vxor.u32 %v155, 2147483648
  %v159 = vmul.f32 %v157, 1.442695
  %v160 = vpow.pop %v159
  %v161 = vmul.f32 %v158, 1.442695
  %v162 = vpow.pop %v161
  %v163 = vadd.f32 %v160, 1.0
  %v164 = vadd.f32 %v162, 1.0
  %v165 = vrcp.pop %v163
  %v166 = vmul.f32 %v163, %v165
  %v167 = vsub.f32 1.0, %v166
  %v168 = vmul.f32 %v165, %v167
  %v169 = vadd.f32 %v165, %v168
  %vm170 = vweird.f32 %v163
  %vm171 = vweird.f32 %v165
  %vm172 = vmor %vm170, %vm171
  %v173 = vsel %vm172, %v165, %v169
  %v174 = vand.u32 2147483647, %v163
  %vm175 = vcmp.eq.f32.partialorder %v174, 8.507059e+37
  %v176 = vand.u32 %v163, 2147483648
  %v177 = vor.u32 1.1754944e-38, %v176
  %v178 = vsel %vm175, %v177, %v173
  %v179 = vmul.f32 1.0, %v178
  %v180 = vrcp.pop %v164
  %v181 = vmul.f32 %v164, %v180
  %v182 = vsub.f32 1.0, %v181
  %v183 = vmul.f32 %v180, %v182
  %v184 = vadd.f32 %v180, %v183
  %vm185 = vweird.f32 %v164
  %vm186 = vweird.f32 %v180
  %vm187 = vmor %vm185, %vm186
  %v188 = vsel %vm187, %v180, %v184
  %v189 = vand.u32 2147483647, %v164
  %vm190 = vcmp.eq.f32.partialorder %v189, 8.507059e+37
  %v191 = vand.u32 %v164, 2147483648
  %v192 = vor.u32 1.1754944e-38, %v191
  %v193 = vsel %vm190, %v192, %v188
  %v194 = vmul.f32 1.0, %v193
  %v195 = vmul.f32 %v153, %v179
  %v196 = vmul.f32 %v155, %v194
  %v197 = vld [vmem:[#allocation3] sm:$0xff]
  %v198 = vld [vmem:[#allocation3 + $0x8] sm:$0xff]
  %v199 = vpack.c.bf16 %v196, %v195
  %v200 = vld [vmem:[%s5] sm:$0xf]
  %v201 = vld [vmem:[%s5 + $0x4] sm:$0xf]
  %v202 = vld [vmem:[%s5 + $0x8] sm:$0xf]
  %v203 = vld [vmem:[%s5 + $0xc] sm:$0xf]
  %v204 = vld [vmem:[%s5 + $0x10] sm:$0xf]
  %v205 = vld [vmem:[%s5 + $0x14] sm:$0xf]
  %v206 = vld [vmem:[%s5 + $0x18] sm:$0xf]
  %v207 = vld [vmem:[%s5 + $0x1c] sm:$0xf]
  %v216 = vunpack.c.l.b16 %v200
  %v217 = vunpack.c.l.b16 %v201
  %v218 = vunpack.c.l.b16 %v202
  %v219 = vunpack.c.l.b16 %v203
  %v220 = vunpack.c.l.b16 %v204
  %v221 = vunpack.c.l.b16 %v205
  %v222 = vunpack.c.l.b16 %v206
  %v223 = vunpack.c.l.b16 %v207
  %v224 = vpack.c.b16 %v217, %v216
  %v225 = vpack.c.b16 %v219, %v218
  %v226 = vpack.c.b16 %v221, %v220
  %v227 = vpack.c.b16 %v223, %v222
  %vm232 = vcmask 523264
  %v234 = vsel %vm232, %v199, 0
  %236 = vmatpush.bf16.msra.mxu0 0
  %237 = vmatpush.bf16.msra.mxu0 0
  %238 = vmatpush.bf16.msra.mxu0 0
  %239 = vmatpush.bf16.msra.mxu0 0
  %240 = vmatpush.bf16.msra.mxu0 %v227
  %241 = vmatpush.bf16.msra.mxu0 %v226
  %242 = vmatpush.bf16.msra.mxu0 %v225
  %243 = vmatpush.bf16.msra.mxu0 %v224
  %244 = vmatmul.bf16.gmra.mxu0 %v234
  %v245 = vpop.f32.mrf.mxu0
  %v246 = vadd.f32 0.0, %v245
  %v247 = vpop.f32.mrf.mxu0
  %v248 = vadd.f32 0.0, %v247
  %249 = vdwg.mxu0
  %v250 = vadd.f32 %v197, %v246
  %v251 = vadd.f32 %v198, %v248
  %252 = vst.msk [vmem:[#allocation3] sm:$0xff] %vm139, %v250
  %253 = vst.msk [vmem:[#allocation3 + $0x8] sm:$0xff] %vm139, %v251
  // Predicated region
  $region34: #{_lambda_.12} parent=0 // pred_check
    %p254 = pneg %p27
  $region35: #{_lambda_.12} parent=0 // pred_check_branch
    %256 = sbr.rel (%p254) target = $region37
  $region36: #{_lambda_.12} parent=0 // pred_region
    %v257 = vld [vmem:[#allocation3] sm:$0xff]
    %v258 = vld [vmem:[#allocation3 + $0x8] sm:$0xff]
    %v259 = vpack.c.bf16 %v257, %v257
    %v260 = vpack.c.bf16 %v258, %v258
    %vm261 = vcmask 257024
    %262 = vst.msk [vmem:[%s7] sm:$0xf] %vm261, %v259
    %263 = vst.msk [vmem:[%s7 + $0x4] sm:$0xf] %vm261, %v260
  $region37: #{_lambda_.12} parent=0 // pred_fallthru
    _
  // Predicated region
  $region38: #{_lambda_.12} parent=0 // pred_check
    _
  $region39: #{_lambda_.12} parent=0 // pred_check_branch
    %265 = sbr.rel (0) target = $region41
  $region40: #{_lambda_.12} parent=0 // pred_region
    _
  $region41: #{_lambda_.12} parent=0 // pred_fallthru
    _
  // Predicated region
  $region42: #{_lambda_.12} parent=0 // pred_check
    _
  $region43: #{_lambda_.12} parent=0 // pred_check_branch
    %267 = sbr.rel (0) target = $region45
  $region44: #{_lambda_.12} parent=0 // pred_region
    _
  $region45: #{_lambda_.12} parent=0 // pred_fallthru
    _

// kernel: _lambda_.9
$region0: #{_lambda_.9}
  #allocation0 [shape = 'u32[]', space=smem, size = 0x4, offset = 0x4, fixed_abs, tag = 'smem constant byte address 0x4 - core index']
  #allocation1 [shape = 'u32[72,128]{1,0:T(1,128)}', space=vmem, size = 0x9000, scoped, tag = 'internal scratch']
  #allocation2 [shape = 'bf16[16,32]{1,0:T(8,128)(2,1)}', space=vmem, size = 0x1000, scoped, tag = 'scratch operand']
  %s0 = inlined_call_operand.vmem [shape: bf16[16,32], index: 0, kind: input, shape index: {}]
  %s1 = inlined_call_operand.vmem [shape: f32[1,32], index: 1, kind: input, shape index: {}]
  %s2 = inlined_call_operand.vmem [shape: f32[1,32], index: 2, kind: input, shape index: {}]
  %s3 = inlined_call_operand.vmem [shape: bf16[32,32], index: 3, kind: input, shape index: {}]
  %s4 = inlined_call_operand.vmem [shape: bf16[32,32], index: 4, kind: input, shape index: {}]
  %s5 = inlined_call_operand.vmem [shape: bf16[32,32], index: 5, kind: input, shape index: {}]
  %s6 = inlined_call_operand.vmem [shape: f32[1,32], index: 6, kind: input, shape index: {}]
  %s7 = inlined_call_operand.vmem [shape: f32[1,32], index: 7, kind: input, shape index: {}]
  %s8 = inlined_call_operand.vmem [shape: f32[1,32], index: 8, kind: input, shape index: {}]
  %s9 = inlined_call_operand.vmem [shape: bf16[16,32], index: 9, kind: output, shape index: {0}]
  %s10 = inlined_call_operand.vmem [shape: bf16[16,32], index: 10, kind: output, shape index: {1}]
  %s11 = inlined_call_operand.vmem [shape: bf16[16,32], index: 11, kind: output, shape index: {2}]
  %12 = xla_tuple %s9, %s10, %s11
  %s13 = sld [smem:[#allocation0]]
  $region66: #{_lambda_.9} parent=0
    _
  %s15 = ssub.s32 1, %s13
  %s16 = scalar_select 0, %s15, %s13
  // Predicated region
  $region2: #{_lambda_.9} parent=0 // pred_check
    _
  $region3: #{_lambda_.9} parent=0 // pred_check_branch
    %18 = sbr.rel (0) target = $region5
  $region4: #{_lambda_.9} parent=0 // pred_region
    _
  $region5: #{_lambda_.9} parent=0 // pred_fallthru
    _
  // Predicated region
  $region6: #{_lambda_.9} parent=0 // pred_check
    _
  $region7: #{_lambda_.9} parent=0 // pred_check_branch
    %20 = sbr.rel (0) target = $region9
  $region8: #{_lambda_.9} parent=0 // pred_region
    _
  $region9: #{_lambda_.9} parent=0 // pred_fallthru
    _
  // Predicated region
  $region10: #{_lambda_.9} parent=0 // pred_check
    _
  $region11: #{_lambda_.9} parent=0 // pred_check_branch
    %22 = sbr.rel (0) target = $region13
  $region12: #{_lambda_.9} parent=0 // pred_region
    _
  $region13: #{_lambda_.9} parent=0 // pred_fallthru
    _
  // Predicated region
  $region14: #{_lambda_.9} parent=0 // pred_check
    _
  $region15: #{_lambda_.9} parent=0 // pred_check_branch
    %24 = sbr.rel (0) target = $region17
  $region16: #{_lambda_.9} parent=0 // pred_region
    _
  $region17: #{_lambda_.9} parent=0 // pred_fallthru
    _
  // Predicated region
  $region18: #{_lambda_.9} parent=0 // pred_check
    _
  $region19: #{_lambda_.9} parent=0 // pred_check_branch
    %26 = sbr.rel (0) target = $region21
  $region20: #{_lambda_.9} parent=0 // pred_region
    _
  $region21: #{_lambda_.9} parent=0 // pred_fallthru
    _
  // Predicated region
  $region22: #{_lambda_.9} parent=0 // pred_check
    _
  $region23: #{_lambda_.9} parent=0 // pred_check_branch
    %28 = sbr.rel (0) target = $region25
  $region24: #{_lambda_.9} parent=0 // pred_region
    _
  $region25: #{_lambda_.9} parent=0 // pred_fallthru
    _
  // Predicated region
  $region26: #{_lambda_.9} parent=0 // pred_check
    _
  $region27: #{_lambda_.9} parent=0 // pred_check_branch
    %30 = sbr.rel (0) target = $region29
  $region28: #{_lambda_.9} parent=0 // pred_region
    _
  $region29: #{_lambda_.9} parent=0 // pred_fallthru
    _
  // Predicated region
  $region30: #{_lambda_.9} parent=0 // pred_check
    _
  $region31: #{_lambda_.9} parent=0 // pred_check_branch
    %32 = sbr.rel (0) target = $region33
  $region32: #{_lambda_.9} parent=0 // pred_region
    _
  $region33: #{_lambda_.9} parent=0 // pred_fallthru
    _
  // Predicated region
  $region34: #{_lambda_.9} parent=0 // pred_check
    _
  $region35: #{_lambda_.9} parent=0 // pred_check_branch
    %34 = sbr.rel (0) target = $region37
  $region36: #{_lambda_.9} parent=0 // pred_region
    _
  $region37: #{_lambda_.9} parent=0 // pred_fallthru
    _
  %p36 = scmp.eq.s32.totalorder 0, 0
  // Predicated region
  $region38: #{_lambda_.9} parent=0 // pred_check
    %p37 = pneg %p36
  $region39: #{_lambda_.9} parent=0 // pred_check_branch
    %39 = sbr.rel (%p37) target = $region41
  $region40: #{_lambda_.9} parent=0 // pred_region
    %v40 = vld [vmem:[%s0] sm:$0xf]
    %v41 = vld [vmem:[%s0 + $0x4] sm:$0xf]
    %v42 = vunpack.c.l.bf16 %v40
    %v43 = vunpack.c.l.bf16 %v41
    %v44 = vld [vmem:[%s1] sm:$0x1]
    %v45 = vld [vmem:[%s2] sm:$0x1]
    %vm46 = vcmask 261120
    %v47 = vsel %vm46, %v42, 0.0
    %48 = vadd.xlane.f32.xlu0 %v47
    %v49 = vpop.xlane.xlu0 %48
    %v50 = vsel %vm46, %v43, 0.0
    %51 = vadd.xlane.f32.xlu0 %v50
    %v52 = vpop.xlane.xlu0 %51
    %v53 = vrcp.pop 32.0
    %v54 = vmul.f32 32.0, %v53
    %v55 = vsub.f32 1.0, %v54
    %v56 = vmul.f32 %v53, %v55
    %v57 = vadd.f32 %v53, %v56
    %vm58 = vweird.f32 %v53
    %v59 = vsel %vm58, %v53, %v57
    %v60 = vmul.f32 %v49, %v59
    %v61 = vmul.f32 %v52, %v59
    %v62 = vsub.f32 %v42, %v60
    %v63 = vsub.f32 %v43, %v61
    %v64 = vmul.f32 %v62, %v62
    %v65 = vmul.f32 %v63, %v63
    %v66 = vsel %vm46, %v64, 0.0
    %67 = vadd.xlane.f32.xlu0 %v66
    %v68 = vpop.xlane.xlu0 %67
    %v69 = vsel %vm46, %v65, 0.0
    %70 = vadd.xlane.f32.xlu0 %v69
    %v71 = vpop.xlane.xlu0 %70
    %v72 = vmul.f32 %v68, %v59
    %v73 = vmul.f32 %v71, %v59
    %v74 = vadd.f32 %v72, 1e-05
    %v75 = vadd.f32 %v73, 1e-05
    %v76 = vrsqrt.pop %v74
    %v77 = vmul.f32 %v76, %v74
    %v78 = vmul.f32 %v77, %v76
    %v79 = vmul.f32 0.5, %v78
    %v80 = vsub.f32 1.5, %v79
    %v81 = vmul.f32 %v76, %v80
    %vm82 = vweird.f32 %v74
    %vm83 = vweird.f32 %v76
    %vm84 = vmor %vm82, %vm83
    %v85 = vsel %vm84, %v76, %v81
    %v86 = vrsqrt.pop %v75
    %v87 = vmul.f32 %v86, %v75
    %v88 = vmul.f32 %v87, %v86
    %v89 = vmul.f32 0.5, %v88
    %v90 = vsub.f32 1.5, %v89
    %v91 = vmul.f32 %v86, %v90
    %vm92 = vweird.f32 %v75
    %vm93 = vweird.f32 %v86
    %vm94 = vmor %vm92, %vm93
    %v95 = vsel %vm94, %v86, %v91
    %v96 = vmul.f32 %v62, %v85
    %v97 = vmul.f32 %v63, %v95
    %v99 = vperm.slane %v44, 0
    %v101 = vmul.f32 %v96, %v99
    %v102 = vmul.f32 %v97, %v99
    %v104 = vperm.slane %v45, 0
    %v106 = vadd.f32 %v101, %v104
    %v107 = vadd.f32 %v102, %v104
    %v108 = vpack.c.bf16 %v106, %v106
    %v109 = vpack.c.bf16 %v107, %v107
    %vm110 = vcmask 257024
    %111 = vst.msk [vmem:[#allocation2] sm:$0xf] %vm110, %v108
    %112 = vst.msk [vmem:[#allocation2 + $0x4] sm:$0xf] %vm110, %v109
  $region41: #{_lambda_.9} parent=0 // pred_fallthru
    _
  %v113 = vld [vmem:[#allocation2] sm:$0xf]
  %v114 = vld [vmem:[#allocation2 + $0x4] sm:$0xf]
  %v115 = vld [vmem:[%s3] sm:$0xf]
  %v116 = vld [vmem:[%s3 + $0x4] sm:$0xf]
  %v117 = vld [vmem:[%s3 + $0x8] sm:$0xf]
  %v118 = vld [vmem:[%s3 + $0xc] sm:$0xf]
  %v119 = vld [vmem:[%s6] sm:$0x1]
  %v121 = vperm.slane %v119, 0
  %v125 = vunpack.c.l.b16 %v113
  %v126 = vunpack.c.l.b16 %v114
  %v127 = vpack.c.b16 %v126, %v125
  %v132 = vunpack.c.l.b16 %v115
  %v133 = vunpack.c.l.b16 %v116
  %v134 = vunpack.c.l.b16 %v117
  %v135 = vunpack.c.l.b16 %v118
  %v136 = vpack.c.b16 %v133, %v132
  %v137 = vpack.c.b16 %v135, %v134
  %vm140 = vcmask 261120
  %v142 = vsel %vm140, %v127, 0
  %144 = vmatpush.bf16.msra.mxu0 0
  %145 = vmatpush.bf16.msra.mxu0 0
  %146 = vmatpush.bf16.msra.mxu0 0
  %147 = vmatpush.bf16.msra.mxu0 0
  %148 = vmatpush.bf16.msra.mxu0 0
  %149 = vmatpush.bf16.msra.mxu0 0
  %150 = vmatpush.bf16.msra.mxu0 %v137
  %151 = vmatpush.bf16.msra.mxu0 %v136
  %152 = vmatmul.bf16.gmra.mxu0 %v142
  %v153 = vpop.f32.mrf.mxu0
  %v154 = vadd.f32 %v121, %v153
  %v155 = vpop.f32.mrf.mxu0
  %v156 = vadd.f32 %v121, %v155
  %157 = vdwg.mxu0
  %v158 = vpack.c.bf16 %v154, %v154
  %v159 = vpack.c.bf16 %v156, %v156
  %vm160 = vcmask 257024
  %161 = vst.msk [vmem:[%s9] sm:$0xf] %vm160, %v158
  %162 = vst.msk [vmem:[%s9 + $0x4] sm:$0xf] %vm160, %v159
  %v163 = vld [vmem:[%s4] sm:$0xf]
  %v164 = vld [vmem:[%s4 + $0x4] sm:$0xf]
  %v165 = vld [vmem:[%s4 + $0x8] sm:$0xf]
  %v166 = vld [vmem:[%s4 + $0xc] sm:$0xf]
  %v167 = vld [vmem:[%s7] sm:$0x1]
  %v169 = vperm.slane %v167, 0
  %v175 = vunpack.c.l.b16 %v163
  %v176 = vunpack.c.l.b16 %v164
  %v177 = vunpack.c.l.b16 %v165
  %v178 = vunpack.c.l.b16 %v166
  %v179 = vpack.c.b16 %v176, %v175
  %v180 = vpack.c.b16 %v178, %v177
  %183 = vmatpush.bf16.msra.mxu0 0
  %184 = vmatpush.bf16.msra.mxu0 0
  %185 = vmatpush.bf16.msra.mxu0 0
  %186 = vmatpush.bf16.msra.mxu0 0
  %187 = vmatpush.bf16.msra.mxu0 0
  %188 = vmatpush.bf16.msra.mxu0 0
  %189 = vmatpush.bf16.msra.mxu0 %v180
  %190 = vmatpush.bf16.msra.mxu0 %v179
  %191 = vmatmul.bf16.gmra.mxu0 %v142
  %v192 = vpop.f32.mrf.mxu0
  %v193 = vadd.f32 %v169, %v192
  %v194 = vpop.f32.mrf.mxu0
  %v195 = vadd.f32 %v169, %v194
  %196 = vdwg.mxu0
  %v197 = vpack.c.bf16 %v193, %v193
  %v198 = vpack.c.bf16 %v195, %v195
  %199 = vst.msk [vmem:[%s10] sm:$0xf] %vm160, %v197
  %200 = vst.msk [vmem:[%s10 + $0x4] sm:$0xf] %vm160, %v198
  %v201 = vld [vmem:[%s5] sm:$0xf]
  %v202 = vld [vmem:[%s5 + $0x4] sm:$0xf]
  %v203 = vld [vmem:[%s5 + $0x8] sm:$0xf]
  %v204 = vld [vmem:[%s5 + $0xc] sm:$0xf]
  %v205 = vld [vmem:[%s8] sm:$0x1]
  %v207 = vperm.slane %v205, 0
  %v213 = vunpack.c.l.b16 %v201
  %v214 = vunpack.c.l.b16 %v202
  %v215 = vunpack.c.l.b16 %v203
  %v216 = vunpack.c.l.b16 %v204
  %v217 = vpack.c.b16 %v214, %v213
  %v218 = vpack.c.b16 %v216, %v215
  %221 = vmatpush.bf16.msra.mxu0 0
  %222 = vmatpush.bf16.msra.mxu0 0
  %223 = vmatpush.bf16.msra.mxu0 0
  %224 = vmatpush.bf16.msra.mxu0 0
  %225 = vmatpush.bf16.msra.mxu0 0
  %226 = vmatpush.bf16.msra.mxu0 0
  %227 = vmatpush.bf16.msra.mxu0 %v218
  %228 = vmatpush.bf16.msra.mxu0 %v217
  %229 = vmatmul.bf16.gmra.mxu0 %v142
  %v230 = vpop.f32.mrf.mxu0
  %v231 = vadd.f32 %v207, %v230
  %v232 = vpop.f32.mrf.mxu0
  %v233 = vadd.f32 %v207, %v232
  %234 = vdwg.mxu0
  %v235 = vpack.c.bf16 %v231, %v231
  %v236 = vpack.c.bf16 %v233, %v233
  %237 = vst.msk [vmem:[%s11] sm:$0xf] %vm160, %v235
  %238 = vst.msk [vmem:[%s11 + $0x4] sm:$0xf] %vm160, %v236
  // Predicated region
  $region42: #{_lambda_.9} parent=0 // pred_check
    _
  $region43: #{_lambda_.9} parent=0 // pred_check_branch
    %240 = sbr.rel (0) target = $region45
  $region44: #{_lambda_.9} parent=0 // pred_region
    _
  $region45: #{_lambda_.9} parent=0 // pred_fallthru
    _
  // Predicated region
  $region46: #{_lambda_.9} parent=0 // pred_check
    _
  $region47: #{_lambda_.9} parent=0 // pred_check_branch
    %242 = sbr.rel (0) target = $region49
  $region48: #{_lambda_.9} parent=0 // pred_region
    _
  $region49: #{_lambda_.9} parent=0 // pred_fallthru
    _
  // Predicated region
  $region50: #{_lambda_.9} parent=0 // pred_check
    _
  $region51: #{_lambda_.9} parent=0 // pred_check_branch
    %244 = sbr.rel (0) target = $region53
  $region52: #{_lambda_.9} parent=0 // pred_region
    _
  $region53: #{_lambda_.9} parent=0 // pred_fallthru
    _
  // Predicated region
  $region54: #{_lambda_.9} parent=0 // pred_check
    _
  $region55: #{_lambda_.9} parent=0 // pred_check_branch
    %246 = sbr.rel (0) target = $region57
  $region56: #{_lambda_.9} parent=0 // pred_region
    _
  $region57: #{_lambda_.9} parent=0 // pred_fallthru
    _
  // Predicated region
  $region58: #{_lambda_.9} parent=0 // pred_check
    _
  $region59: #{_lambda_.9} parent=0 // pred_check_branch
    %248 = sbr.rel (0) target = $region61
  $region60: #{_lambda_.9} parent=0 // pred_region
    _
  $region61: #{_lambda_.9} parent=0 // pred_fallthru
    _
  // Predicated region
  $region62: #{_lambda_.9} parent=0 // pred_check
    _
  $region63: #{_lambda_.9} parent=0 // pred_check_branch
    %250 = sbr.rel (0) target = $region65
  $region64: #{_lambda_.9} parent=0 // pred_region
    _
  $region65: #{_lambda_.9} parent=0 // pred_fallthru
    _

// kernel: _lambda_.10
$region0: #{_lambda_.10}
  #allocation0 [shape = 'u32[]', space=smem, size = 0x4, offset = 0x4, fixed_abs, tag = 'smem constant byte address 0x4 - core index']
  #allocation1 [shape = 'u32[72,128]{1,0:T(1,128)}', space=vmem, size = 0x9000, scoped, tag = 'internal scratch']
  #allocation2 [shape = 'f32[8,2]{1,0:T(8,128)}', space=vmem, size = 0x1000, scoped, tag = 'scratch operand']
  #allocation3 [shape = 'f32[8,2]{1,0:T(8,128)}', space=vmem, size = 0x1000, scoped, tag = 'scratch operand']
  #allocation4 [shape = 'f32[2,8,16]{2,1,0:T(8,128)}', space=vmem, size = 0x2000, scoped, tag = 'scratch operand']
  %s0 = inlined_call_operand.vmem [shape: bf16[2,8,32], index: 0, kind: input, shape index: {}]
  %s1 = inlined_call_operand.vmem [shape: bf16[2,8,32], index: 1, kind: input, shape index: {}]
  %s2 = inlined_call_operand.vmem [shape: bf16[2,8,32], index: 2, kind: input, shape index: {}]
  %s3 = inlined_call_operand.vmem [shape: bf16[2,8,32], index: 3, kind: output, shape index: {}]
  %s4 = sld [smem:[#allocation0]]
  $region57: #{_lambda_.10} parent=0
    _
  %s6 = ssub.s32 1, %s4
  %s7 = scalar_select 0, %s6, %s4
  loop: start=0, step=1, limit=4
  $region2: #{_lambda_.10} parent=0 // loop_pre_header
    _
  $region3: #{_lambda_.10} parent=0 // loop_header
    %s9 = sphi 0, %s13
    %p10 = scmp.ge.s32.totalorder %s9, 4
    %s16 = sphi 0, %s35
    %s17 = sphi 0, %s31
    %s18 = sphi 0, %s27
    %s19 = sphi 0, %s16
    %s20 = sphi 0, %s17
    %s21 = sphi 0, %s18
    %s22 = sphi 0, %s19
    %s23 = sphi 0, %s20
    %s24 = sphi 0, %s21
    %s40 = sphi 0, %s42
    %s43 = sphi 0, %s40
    %s44 = sphi 0, %s43
    %s60 = sphi 0, %s44
    %s68 = sphi 0, %s70
    %s71 = sphi 0, %s68
    %s72 = sphi 0, %s71
    %s88 = sphi 0, %s72
    %s96 = sphi 0, %s98
    %s99 = sphi 0, %s96
    %s100 = sphi 0, %s99
    %s116 = sphi 0, %s100
    %s124 = sphi 0, %s126
    %s127 = sphi 0, %s124
    %s128 = sphi 0, %s127
    %s144 = sphi 0, %s128
  $region4: #{_lambda_.10} parent=0 // loop_header_branch
    %12 = sbr.rel (%p10) target = $region8
  $region5: #{_lambda_.10} parent=0 // loop_body
    %s14 = ssub.s32 %s9, 1
    %s15 = ssub.s32 %s9, 2
    %s25 = sadd.s32 1, %s18
    %p26 = scmp.ge.s32.totalorder %s25, 1
    %s27 = scalar_select %p26, 0, %s25
    %s28 = sadd.s32 1, %s17
    %s29 = scalar_select %p26, %s28, %s17
    %p30 = scmp.ge.s32.totalorder %s29, 1
    %s31 = scalar_select %p30, 0, %s29
    %s32 = sadd.s32 1, %s16
    %s33 = scalar_select %p30, %s32, %s16
    %p34 = scmp.ge.s32.totalorder %s33, 2
    %s35 = scalar_select %p34, 0, %s33
    %s36 = ssub.s32 %s16, %s35
    %s37 = ssub.s32 %s17, %s31
    %s38 = sor.u32 %s36, %s37
    %p39 = scmp.eq.s32.totalorder %s38, 0
    %s41 = sadd.s32 %s40, 1
    %s42 = scalar_select %p39, %s40, %s41
    %p45 = pneg %p39
    %p46 = scmp.eq.s32.totalorder %s9, 1
    %p47 = por %p45, %p46
    %p48 = scmp.ne.s32.totalorder %s40, %s43
    %p49 = scmp.eq.s32.totalorder %s9, 0
    %p50 = por %p48, %p49
    %p51 = scmp.ne.s32.totalorder %s40, %s43
    %p52 = scmp.eq.s32.totalorder %s14, 1
    %p53 = por %p51, %p52
    %p54 = scmp.ne.s32.totalorder %s43, %s44
    %p55 = scmp.eq.s32.totalorder %s14, 0
    %p56 = por %p54, %p55
    %p57 = scmp.ne.s32.totalorder %s43, %s44
    %p58 = scmp.eq.s32.totalorder %s15, 1
    %p59 = por %p57, %p58
    %p61 = scmp.ne.s32.totalorder %s44, %s60
    %p62 = scmp.eq.s32.totalorder %s15, 0
    %p63 = por %p61, %p62
    %s64 = ssub.s32 %s16, %s35
    %s65 = ssub.s32 %s18, %s27
    %s66 = sor.u32 %s64, %s65
    %p67 = scmp.eq.s32.totalorder %s66, 0
    %s69 = sadd.s32 %s68, 1
    %s70 = scalar_select %p67, %s68, %s69
    %p73 = pneg %p67
    %p74 = scmp.eq.s32.totalorder %s9, 1
    %p75 = por %p73, %p74
    %p76 = scmp.ne.s32.totalorder %s68, %s71
    %p77 = scmp.eq.s32.totalorder %s9, 0
    %p78 = por %p76, %p77
    %p79 = scmp.ne.s32.totalorder %s68, %s71
    %p80 = scmp.eq.s32.totalorder %s14, 1
    %p81 = por %p79, %p80
    %p82 = scmp.ne.s32.totalorder %s71, %s72
    %p83 = scmp.eq.s32.totalorder %s14, 0
    %p84 = por %p82, %p83
    %p85 = scmp.ne.s32.totalorder %s71, %s72
    %p86 = scmp.eq.s32.totalorder %s15, 1
    %p87 = por %p85, %p86
    %p89 = scmp.ne.s32.totalorder %s72, %s88
    %p90 = scmp.eq.s32.totalorder %s15, 0
    %p91 = por %p89, %p90
    %s92 = ssub.s32 %s16, %s35
    %s93 = ssub.s32 %s18, %s27
    %s94 = sor.u32 %s92, %s93
    %p95 = scmp.eq.s32.totalorder %s94, 0
    %s97 = sadd.s32 %s96, 1
    %s98 = scalar_select %p95, %s96, %s97
    %p101 = pneg %p95
    %p102 = scmp.eq.s32.totalorder %s9, 1
    %p103 = por %p101, %p102
    %p104 = scmp.ne.s32.totalorder %s96, %s99
    %p105 = scmp.eq.s32.totalorder %s9, 0
    %p106 = por %p104, %p105
    %p107 = scmp.ne.s32.totalorder %s96, %s99
    %p108 = scmp.eq.s32.totalorder %s14, 1
    %p109 = por %p107, %p108
    %p110 = scmp.ne.s32.totalorder %s99, %s100
    %p111 = scmp.eq.s32.totalorder %s14, 0
    %p112 = por %p110, %p111
    %p113 = scmp.ne.s32.totalorder %s99, %s100
    %p114 = scmp.eq.s32.totalorder %s15, 1
    %p115 = por %p113, %p114
    %p117 = scmp.ne.s32.totalorder %s100, %s116
    %p118 = scmp.eq.s32.totalorder %s15, 0
    %p119 = por %p117, %p118
    %s120 = ssub.s32 %s16, %s35
    %s121 = ssub.s32 %s17, %s31
    %s122 = sor.u32 %s120, %s121
    %p123 = scmp.eq.s32.totalorder %s122, 0
    %s125 = sadd.s32 %s124, 1
    %s126 = scalar_select %p123, %s124, %s125
    %p129 = pneg %p123
    %p130 = scmp.eq.s32.totalorder %s9, 1
    %p131 = por %p129, %p130
    %p132 = scmp.ne.s32.totalorder %s124, %s127
    %p133 = scmp.eq.s32.totalorder %s9, 0
    %p134 = por %p132, %p133
    %p135 = scmp.ne.s32.totalorder %s124, %s127
    %p136 = scmp.eq.s32.totalorder %s14, 1
    %p137 = por %p135, %p136
    %p138 = scmp.ne.s32.totalorder %s127, %s128
    %p139 = scmp.eq.s32.totalorder %s14, 0
    %p140 = por %p138, %p139
    %p141 = scmp.ne.s32.totalorder %s127, %s128
    %p142 = scmp.eq.s32.totalorder %s15, 1
    %p143 = por %p141, %p142
    %p145 = scmp.ne.s32.totalorder %s128, %s144
    %p146 = scmp.eq.s32.totalorder %s15, 0
    %p147 = por %p145, %p146
    %p148 = scmp.le.s32.totalorder 1, %s9
    %p149 = scmp.lt.s32.totalorder %s9, 3
    %p150 = pnand %p148, %p149
    %p151 = pneg %p150
    // Predicated region
    $region9: #{_lambda_.10} parent=5 // pred_check
      _
    $region10: #{_lambda_.10} parent=5 // pred_check_branch
      %153 = sbr.rel (%p150) target = $region12
    $region11: #{_lambda_.10} parent=5 // pred_region
      %s154 = ssub.s32 %s9, 1
    $region12: #{_lambda_.10} parent=5 // pred_fallthru
      _
    %p155 = scmp.lt.s32.totalorder %s9, 2
    // Predicated region
    $region13: #{_lambda_.10} parent=5 // pred_check
      %p156 = pneg %p155
    $region14: #{_lambda_.10} parent=5 // pred_check_branch
      %158 = sbr.rel (%p156) target = $region16
    $region15: #{_lambda_.10} parent=5 // pred_region
      // Predicated region
      $region17: #{_lambda_.10} parent=15 // pred_check
        %p159 = pneg %p50
      $region18: #{_lambda_.10} parent=15 // pred_check_branch
        %161 = sbr.rel (%p159) target = $region20
      $region19: #{_lambda_.10} parent=15 // pred_region
        %p162 = scmp.lt.s32.totalorder %s16, 1
        %s163 = scalar_select %p162, %s16, 1
        %p164 = scmp.lt.s32.totalorder %s17, 0
        %s165 = scalar_select %p164, %s17, 0
        %s166 = sadd.s32 %s165, %s163
        %s167 = smul.addr %s166, 4
        %s168 = scalar_lea.vmem %s0, %s167
      $region20: #{_lambda_.10} parent=15 // pred_fallthru
        _
      // Predicated region
      $region21: #{_lambda_.10} parent=15 // pred_check
        %p169 = pneg %p78
      $region22: #{_lambda_.10} parent=15 // pred_check_branch
        %171 = sbr.rel (%p169) target = $region24
      $region23: #{_lambda_.10} parent=15 // pred_region
        %p172 = scmp.lt.s32.totalorder %s16, 1
        %s173 = scalar_select %p172, %s16, 1
        %p174 = scmp.lt.s32.totalorder %s18, 0
        %s175 = scalar_select %p174, %s18, 0
        %s176 = sadd.s32 %s175, %s173
        %s177 = smul.addr %s176, 4
        %s178 = scalar_lea.vmem %s1, %s177
      $region24: #{_lambda_.10} parent=15 // pred_fallthru
        _
      // Predicated region
      $region25: #{_lambda_.10} parent=15 // pred_check
        %p179 = pneg %p106
      $region26: #{_lambda_.10} parent=15 // pred_check_branch
        %181 = sbr.rel (%p179) target = $region28
      $region27: #{_lambda_.10} parent=15 // pred_region
        %p182 = scmp.lt.s32.totalorder %s16, 1
        %s183 = scalar_select %p182, %s16, 1
        %p184 = scmp.lt.s32.totalorder %s18, 0
        %s185 = scalar_select %p184, %s18, 0
        %s186 = sadd.s32 %s185, %s183
        %s187 = smul.addr %s186, 4
        %s188 = scalar_lea.vmem %s2, %s187
      $region28: #{_lambda_.10} parent=15 // pred_fallthru
        _
    $region16: #{_lambda_.10} parent=5 // pred_fallthru
      _
    %p189 = scmp.le.s32.totalorder 1, %s9
    %p190 = scmp.lt.s32.totalorder %s9, 3
    %p191 = pnand %p189, %p190
    %p192 = pneg %p191
    // Predicated region
    $region29: #{_lambda_.10} parent=5 // pred_check
      _
    $region30: #{_lambda_.10} parent=5 // pred_check_branch
      %194 = sbr.rel (%p191) target = $region32
    $region31: #{_lambda_.10} parent=5 // pred_region
      %s195 = ssub.s32 %s9, 1
      %p196 = scmp.lt.s32.totalorder %s19, 1
      %s197 = scalar_select %p196, %s19, 1
      %p198 = scmp.lt.s32.totalorder %s20, 0
      %s199 = scalar_select %p198, %s20, 0
      %s200 = sadd.s32 %s199, %s197
      %s201 = smul.addr %s200, 4
      %s202 = scalar_lea.vmem %s0, %s201
      %p203 = pneg %p56
      %p204 = pneg %p53
      %p205 = scmp.lt.s32.totalorder %s19, 1
      %s206 = scalar_select %p205, %s19, 1
      %p207 = scmp.lt.s32.totalorder %s21, 0
      %s208 = scalar_select %p207, %s21, 0
      %s209 = sadd.s32 %s208, %s206
      %s210 = smul.addr %s209, 4
      %s211 = scalar_lea.vmem %s1, %s210
      %p212 = pneg %p84
      %p213 = pneg %p81
      %p214 = scmp.lt.s32.totalorder %s19, 1
      %s215 = scalar_select %p214, %s19, 1
      %p216 = scmp.lt.s32.totalorder %s21, 0
      %s217 = scalar_select %p216, %s21, 0
      %s218 = sadd.s32 %s217, %s215
      %s219 = smul.addr %s218, 4
      %s220 = scalar_lea.vmem %s2, %s219
      %p221 = pneg %p112
      %p222 = pneg %p109
      %p223 = pneg %p140
      %p224 = pneg %p137
      %p225 = scmp.lt.s32.totalorder %s19, 1
      %s226 = scalar_select %p225, %s19, 1
      %p227 = scmp.lt.s32.totalorder %s20, 0
      %s228 = scalar_select %p227, %s20, 0
      %s229 = sadd.s32 %s228, %s226
      %s230 = smul.addr %s229, 4
      %s231 = scalar_lea.vmem %s3, %s230
      %p232 = scmp.lt.s32.totalorder %s19, 1
      %s233 = scalar_select %p232, %s19, 1
      %p234 = scmp.lt.s32.totalorder %s20, 0
      %s235 = scalar_select %p234, %s20, 0
      %s236 = sadd.s32 %s235, %s233
      %s237 = smul.addr %s236, 4
      %s238 = scalar_lea.vmem %s0, %s237
      %p239 = scmp.lt.s32.totalorder %s19, 1
      %s240 = scalar_select %p239, %s19, 1
      %p241 = scmp.lt.s32.totalorder %s21, 0
      %s242 = scalar_select %p241, %s21, 0
      %s243 = sadd.s32 %s242, %s240
      %s244 = smul.addr %s243, 4
      %s245 = scalar_lea.vmem %s1, %s244
      %p246 = scmp.lt.s32.totalorder %s19, 1
      %s247 = scalar_select %p246, %s19, 1
      %p248 = scmp.lt.s32.totalorder %s21, 0
      %s249 = scalar_select %p248, %s21, 0
      %s250 = sadd.s32 %s249, %s247
      %s251 = smul.addr %s250, 4
      %s252 = scalar_lea.vmem %s2, %s251
      %p253 = scmp.lt.s32.totalorder %s19, 1
      %s254 = scalar_select %p253, %s19, 1
      %p255 = scmp.lt.s32.totalorder %s20, 0
      %s256 = scalar_select %p255, %s20, 0
      %s257 = sadd.s32 %s256, %s254
      %s258 = smul.addr %s257, 4
      %s259 = scalar_lea.vmem %s3, %s258
      %p261 = scmp.eq.s32.totalorder %s21, 0
      // Predicated region
      $region33: #{_lambda_.10} parent=31 // pred_check
        %p262 = pneg %p261
      $region34: #{_lambda_.10} parent=31 // pred_check_branch
        %264 = sbr.rel (%p262) target = $region36
      $region35: #{_lambda_.10} parent=31 // pred_region
        %vm265 = vcmask 15360
        %266 = vst.msk [vmem:[#allocation2] sm:$0xff] %vm265, -inf
        %267 = vst.msk [vmem:[#allocation3] sm:$0xff] %vm265, 0.0
        %vm268 = vcmask 130048
        %269 = vst.msk [vmem:[#allocation4] sm:$0xff] %vm268, 0.0
        %270 = vst.msk [vmem:[#allocation4 + $0x8] sm:$0xff] %vm268, 0.0
      $region36: #{_lambda_.10} parent=31 // pred_fallthru
        _
      %s271 = smul.u32 %s20, 8
      %s272 = smul.u32 %s21, 8
      %s273 = sadd.s32 %s271, 7
      %p274 = scmp.le.s32.totalorder %s272, %s273
      // Predicated region
      $region37: #{_lambda_.10} parent=31 // pred_check
        %p275 = pneg %p274
      $region38: #{_lambda_.10} parent=31 // pred_check_branch
        %277 = sbr.rel (%p275) target = $region40
      $region39: #{_lambda_.10} parent=31 // pred_region
        %v278 = vld [vmem:[%s238] sm:$0xf]
        %v279 = vunpack.c.l.bf16 %v278
        %v280 = vmul.f32 %v279, 0.25
        %v281 = vpack.c.bf16 %v280, %v280
        %v282 = vld [vmem:[%s245] sm:$0xf]
        %v283 = vld [vmem:[%s252] sm:$0xf]
        %v284 = vlaneseq
        %v285 = vshrl.u32 %v284, 7
        %v286 = vstv %s271
        %v287 = vadd.s32 %v286, %v285
        %v288 = vlaneseq
        %v289 = vand.u32 %v288, 127
        %v290 = vstv %s272
        %v291 = vadd.s32 %v290, %v289
        %vm292 = vcmp.le.s32.totalorder %v291, %v287
        %vm293 = vcmp.lt.s32.totalorder %v291, 8
        %vm294 = vmand %vm292, %vm293
        %vm295 = vcmask 130048
        %v297 = vsel %vm295, %v281, 0
        %v300 = vsel %vm295, %v282, 0
        %302 = vmatpush.bf16.xpose.msra.mxu0 0
        %303 = vmatpush.bf16.xpose.msra.mxu0 0
        %304 = vmatpush.bf16.xpose.msra.mxu0 0
        %305 = vmatpush.bf16.xpose.msra.mxu0 0
        %306 = vmatpush.bf16.xpose.msra.mxu0 0
        %307 = vmatpush.bf16.xpose.msra.mxu0 0
        %308 = vmatpush.bf16.xpose.msra.mxu0 0
        %309 = vmatpush.bf16.xpose.msra.mxu0 %v300
        %310 = vmatmul.bf16.gmra.mxu0 %v297
        %v311 = vpop.f32.mrf.mxu0
        %v312 = vadd.f32 0.0, %v311
        %v313 = vpop.f32.mrf.mxu0
        %314 = vdwg.mxu0
        %v315 = vsel %vm294, %v312, -1e+30
        %v316 = vld [vmem:[#allocation2] sm:$0xff]
        %vm317 = vcmask 64512
        %v318 = vsel %vm317, %v315, -inf
        %319 = vmax.xlane.f32.xlu0 %v318
        %v320 = vpop.xlane.xlu0 %319
        %v321 = vmax.f32 %v316, %v320
        %v322 = vsub.f32 %v316, %v321
        %v323 = vmul.f32 %v322, 1.442695
        %v324 = vpow.pop %v323
        %326 = vset.pattern.permute.xlu0 0
        %327 = vperm.xlu0 %326, %v321
        %v328 = vpop.permute.xlu0 %327
        %v330 = vsub.f32 %v315, %v328
        %v331 = vmul.f32 %v330, 1.442695
        %v332 = vpow.pop %v331
        %v333 = vld [vmem:[#allocation3] sm:$0xff]
        %v334 = vmul.f32 %v324, %v333
        %v335 = vsel %vm317, %v332, 0.0
        %336 = vadd.xlane.f32.xlu0 %v335
        %v337 = vpop.xlane.xlu0 %336
        %v338 = vadd.f32 %v334, %v337
        %vm339 = vcmask 7168
        %340 = vst.msk [vmem:[#allocation3] sm:$0xff] %vm339, %v338
        %v341 = vld [vmem:[#allocation4] sm:$0xff]
        %343 = vset.pattern.permute.xlu0 0
        %344 = vperm.xlu0 %343, %v324
        %v345 = vpop.permute.xlu0 %344
        %v347 = vmul.f32 %v345, %v341
        %v348 = vpack.c.bf16 %v332, %v332
        %v350 = vsel %vm317, %v348, 0
        %vm352 = vcmask 1043456
        %v354 = vsel %vm352, %v283, 0
        %356 = vmatpush.bf16.msra.mxu0 0
        %357 = vmatpush.bf16.msra.mxu0 0
        %358 = vmatpush.bf16.msra.mxu0 0
        %359 = vmatpush.bf16.msra.mxu0 0
        %360 = vmatpush.bf16.msra.mxu0 0
        %361 = vmatpush.bf16.msra.mxu0 0
        %362 = vmatpush.bf16.msra.mxu0 0
        %363 = vmatpush.bf16.msra.mxu0 %v354
        %364 = vmatmul.bf16.gmra.mxu0 %v350
        %v365 = vpop.f32.mrf.mxu0
        %v366 = vadd.f32 0.0, %v365
        %v367 = vpop.f32.mrf.mxu0
        %368 = vdwg.mxu0
        %v369 = vadd.f32 %v347, %v366
        %370 = vst.msk [vmem:[#allocation4] sm:$0xff] %vm295, %v369
        %371 = vst.msk [vmem:[#allocation2] sm:$0xff] %vm339, %v321
        %v373 = vunpack.c.l.b16 %v281
        %v374 = vpack.c.b16 %v373, %v373
        %375 = vrot.lane.b32.xlu0 %v374, 112
        %v376 = vpop.permute.xlu0 %375
        %v378 = vunpack.c.l.b16 %v282
        %v379 = vpack.c.b16 %v378, %v378
        %380 = vrot.lane.b32.xlu0 %v379, 112
        %v381 = vpop.permute.xlu0 %380
        %v383 = vsel %vm295, %v376, 0
        %v386 = vsel %vm295, %v381, 0
        %388 = vmatpush.bf16.xpose.msra.mxu0 0
        %389 = vmatpush.bf16.xpose.msra.mxu0 0
        %390 = vmatpush.bf16.xpose.msra.mxu0 0
        %391 = vmatpush.bf16.xpose.msra.mxu0 0
        %392 = vmatpush.bf16.xpose.msra.mxu0 0
        %393 = vmatpush.bf16.xpose.msra.mxu0 0
        %394 = vmatpush.bf16.xpose.msra.mxu0 0
        %395 = vmatpush.bf16.xpose.msra.mxu0 %v386
        %396 = vmatmul.bf16.gmra.mxu0 %v383
        %v397 = vpop.f32.mrf.mxu0
        %v398 = vadd.f32 0.0, %v397
        %v399 = vpop.f32.mrf.mxu0
        %400 = vdwg.mxu0
        %v401 = vsel %vm294, %v398, -1e+30
        %v402 = vld [vmem:[#allocation2] sm:$0xff]
        %v403 = vsel %vm317, %v401, -inf
        %404 = vmax.xlane.f32.xlu0 %v403
        %v405 = vpop.xlane.xlu0 %404
        %v406 = vmax.f32 %v402, %v405
        %v407 = vsub.f32 %v402, %v406
        %v408 = vmul.f32 %v407, 1.442695
        %v409 = vpow.pop %v408
        %411 = vset.pattern.permute.xlu0 1
        %412 = vperm.xlu0 %411, %v406
        %v413 = vpop.permute.xlu0 %412
        %v415 = vsub.f32 %v401, %v413
        %v416 = vmul.f32 %v415, 1.442695
        %v417 = vpow.pop %v416
        %v418 = vld [vmem:[#allocation3] sm:$0xff]
        %v419 = vmul.f32 %v409, %v418
        %v420 = vsel %vm317, %v417, 0.0
        %421 = vadd.xlane.f32.xlu0 %v420
        %v422 = vpop.xlane.xlu0 %421
        %v423 = vadd.f32 %v419, %v422
        %vm424 = vcmask 15368
        %425 = vst.msk [vmem:[#allocation3] sm:$0xff] %vm424, %v423
        %s426 = scalar_lea.vmem [#allocation4], 8
        %v427 = vld [vmem:[%s426] sm:$0xff]
        %429 = vset.pattern.permute.xlu0 1
        %430 = vperm.xlu0 %429, %v409
        %v431 = vpop.permute.xlu0 %430
        %v433 = vmul.f32 %v431, %v427
        %v434 = vpack.c.bf16 %v417, %v417
        %v436 = vunpack.c.l.b16 %v283
        %v437 = vpack.c.b16 %v436, %v436
        %438 = vrot.lane.b32.xlu0 %v437, 112
        %v439 = vpop.permute.xlu0 %438
        %v441 = vsel %vm317, %v434, 0
        %v444 = vsel %vm352, %v439, 0
        %446 = vmatpush.bf16.msra.mxu0 0
        %447 = vmatpush.bf16.msra.mxu0 0
        %448 = vmatpush.bf16.msra.mxu0 0
        %449 = vmatpush.bf16.msra.mxu0 0
        %450 = vmatpush.bf16.msra.mxu0 0
        %451 = vmatpush.bf16.msra.mxu0 0
        %452 = vmatpush.bf16.msra.mxu0 0
        %453 = vmatpush.bf16.msra.mxu0 %v444
        %454 = vmatmul.bf16.gmra.mxu0 %v441
        %v455 = vpop.f32.mrf.mxu0
        %v456 = vadd.f32 0.0, %v455
        %v457 = vpop.f32.mrf.mxu0
        %458 = vdwg.mxu0
        %v459 = vadd.f32 %v433, %v456
        %460 = vst.msk [vmem:[%s426] sm:$0xff] %vm295, %v459
        %461 = vst.msk [vmem:[#allocation2] sm:$0xff] %vm424, %v406
      $region40: #{_lambda_.10} parent=31 // pred_fallthru
        _
      // Predicated region
      $region41: #{_lambda_.10} parent=31 // pred_check
        %p462 = pneg %p261
      $region42: #{_lambda_.10} parent=31 // pred_check_branch
        %464 = sbr.rel (%p462) target = $region44
      $region43: #{_lambda_.10} parent=31 // pred_region
        %v465 = vld [vmem:[#allocation3] sm:$0xff]
        %v466 = vrcp.pop %v465
        %v467 = vld [vmem:[#allocation4] sm:$0xff]
        %469 = vset.pattern.permute.xlu0 0
        %470 = vperm.xlu0 %469, %v466
        %v471 = vpop.permute.xlu0 %470
        %v473 = vmul.f32 %v467, %v471
        %v474 = vpack.c.bf16 %v473, %v473
        %s475 = scalar_lea.vmem [#allocation4], 8
        %v476 = vld [vmem:[%s475] sm:$0xff]
        %477 = vset.pattern.permute.xlu0 1
        %478 = vperm.xlu0 %477, %v466
        %v479 = vpop.permute.xlu0 %478
        %v481 = vmul.f32 %v476, %v479
        %v482 = vpack.c.bf16 %v481, %v481
        %v484 = vunpack.c.l.b16 %v482
        %v485 = vpack.c.b16 %v484, %v484
        %486 = vrot.lane.b32.xlu0 %v485, 16
        %v487 = vpop.permute.xlu0 %486
        %vm488 = vcmask 130048
        %v491 = vsel %vm488, %v474, %v487
        %vm493 = vcmask 257024
        %494 = vst.msk [vmem:[%s259] sm:$0xf] %vm493, %v491
      $region44: #{_lambda_.10} parent=31 // pred_fallthru
        _
      %p495 = scmp.lt.s32.totalorder %s19, 1
      %s496 = scalar_select %p495, %s19, 1
      %p497 = scmp.lt.s32.totalorder %s20, 0
      %s498 = scalar_select %p497, %s20, 0
      %s499 = sadd.s32 %s498, %s496
      %s500 = smul.addr %s499, 4
      %s501 = scalar_lea.vmem %s3, %s500
      // Predicated region
      $region45: #{_lambda_.10} parent=31 // pred_check
        %p502 = pneg %p137
      $region46: #{_lambda_.10} parent=31 // pred_check_branch
        %504 = sbr.rel (%p502) target = $region48
      $region47: #{_lambda_.10} parent=31 // pred_region
        _
      $region48: #{_lambda_.10} parent=31 // pred_fallthru
        _
    $region32: #{_lambda_.10} parent=5 // pred_fallthru
      _
    %p505 = scmp.le.s32.totalorder 2, %s9
    // Predicated region
    $region49: #{_lambda_.10} parent=5 // pred_check
      %p506 = pneg %p505
    $region50: #{_lambda_.10} parent=5 // pred_check_branch
      %508 = sbr.rel (%p506) target = $region52
    $region51: #{_lambda_.10} parent=5 // pred_region
      %s509 = ssub.s32 %s9, 2
      // Predicated region
      $region53: #{_lambda_.10} parent=51 // pred_check
        %p510 = pneg %p143
      $region54: #{_lambda_.10} parent=51 // pred_check_branch
        %512 = sbr.rel (%p510) target = $region56
      $region55: #{_lambda_.10} parent=51 // pred_region
        %p513 = scmp.lt.s32.totalorder %s22, 1
        %s514 = scalar_select %p513, %s22, 1
        %p515 = scmp.lt.s32.totalorder %s23, 0
        %s516 = scalar_select %p515, %s23, 0
        %s517 = sadd.s32 %s516, %s514
        %s518 = smul.addr %s517, 4
        %s519 = scalar_lea.vmem %s3, %s518
      $region56: #{_lambda_.10} parent=51 // pred_fallthru
        _
    $region52: #{_lambda_.10} parent=5 // pred_fallthru
      _
  $region6: #{_lambda_.10} parent=0 // loop_footer
    %s13 = sadd.s32 1, %s9
  $region7: #{_lambda_.10} parent=0 // loop_footer_branch
    %8 = sbr.rel target = $region3
  $region8: #{_lambda_.10} parent=0 // loop_exit
    _

// kernel: _lambda_.17
$region0: #{_lambda_.17}
  #allocation0 [shape = 'u32[]', space=smem, size = 0x4, offset = 0x4, fixed_abs, tag = 'smem constant byte address 0x4 - core index']
  #allocation1 [shape = 'u32[72,128]{1,0:T(1,128)}', space=vmem, size = 0x9000, scoped, tag = 'internal scratch']
  #allocation2 [shape = 'bf16[16,32]{1,0:T(8,128)(2,1)}', space=vmem, size = 0x1000, scoped, tag = 'scratch operand']
  %s0 = inlined_call_operand.vmem [shape: bf16[16,32], index: 0, kind: input, shape index: {}]
  %s1 = inlined_call_operand.vmem [shape: f32[1,32], index: 1, kind: input, shape index: {}]
  %s2 = inlined_call_operand.vmem [shape: f32[1,32], index: 2, kind: input, shape index: {}]
  %s3 = inlined_call_operand.vmem [shape: bf16[16,16], index: 3, kind: input, shape index: {}]
  %s4 = inlined_call_operand.vmem [shape: f32[1,16], index: 4, kind: input, shape index: {}]
  %s5 = inlined_call_operand.hbm [shape: f32[16,2,16], index: 5, kind: output, shape index: {}]
  %s6 = sld [smem:[#allocation0]]
  $region34: #{_lambda_.17} parent=0
    _
  %s8 = ssub.s32 1, %s6
  %s9 = scalar_select 0, %s8, %s6
  $region1: #{_lambda_.17} parent=0
    #allocation3 [shape = 'u8[16384]{0}', space=vmem, size = 0x4000, scoped, tag = 'output window, operand 0, single buffered']
    #allocation4 [shape = 's32[1]{0}', space=sflag, size = 0x4, scoped, tag = 'scoped memory for _lambda_.17']
    %10 = vsyncpa [#allocation4], 0
    // Predicated region
    $region2: #{_lambda_.17} parent=1 // pred_check
      _
    $region3: #{_lambda_.17} parent=1 // pred_check_branch
      %12 = sbr.rel (0) target = $region5
    $region4: #{_lambda_.17} parent=1 // pred_region
      _
    $region5: #{_lambda_.17} parent=1 // pred_fallthru
      _
    // Predicated region
    $region6: #{_lambda_.17} parent=1 // pred_check
      _
    $region7: #{_lambda_.17} parent=1 // pred_check_branch
      %14 = sbr.rel (0) target = $region9
    $region8: #{_lambda_.17} parent=1 // pred_region
      _
    $region9: #{_lambda_.17} parent=1 // pred_fallthru
      _
    // Predicated region
    $region10: #{_lambda_.17} parent=1 // pred_check
      _
    $region11: #{_lambda_.17} parent=1 // pred_check_branch
      %16 = sbr.rel (0) target = $region13
    $region12: #{_lambda_.17} parent=1 // pred_region
      _
    $region13: #{_lambda_.17} parent=1 // pred_fallthru
      _
    // Predicated region
    $region14: #{_lambda_.17} parent=1 // pred_check
      _
    $region15: #{_lambda_.17} parent=1 // pred_check_branch
      %18 = sbr.rel (0) target = $region17
    $region16: #{_lambda_.17} parent=1 // pred_region
      _
    $region17: #{_lambda_.17} parent=1 // pred_fallthru
      _
    // Predicated region
    $region18: #{_lambda_.17} parent=1 // pred_check
      _
    $region19: #{_lambda_.17} parent=1 // pred_check_branch
      %20 = sbr.rel (0) target = $region21
    $region20: #{_lambda_.17} parent=1 // pred_region
      _
    $region21: #{_lambda_.17} parent=1 // pred_fallthru
      _
    %p22 = scmp.eq.s32.totalorder 0, 0
    // Predicated region
    $region22: #{_lambda_.17} parent=1 // pred_check
      %p23 = pneg %p22
    $region23: #{_lambda_.17} parent=1 // pred_check_branch
      %25 = sbr.rel (%p23) target = $region25
    $region24: #{_lambda_.17} parent=1 // pred_region
      %v26 = vld [vmem:[%s0] sm:$0xf]
      %v27 = vld [vmem:[%s0 + $0x4] sm:$0xf]
      %v28 = vunpack.c.l.bf16 %v26
      %v29 = vunpack.c.l.bf16 %v27
      %v30 = vld [vmem:[%s1] sm:$0x1]
      %v31 = vld [vmem:[%s2] sm:$0x1]
      %vm32 = vcmask 261120
      %v33 = vsel %vm32, %v28, 0.0
      %34 = vadd.xlane.f32.xlu0 %v33
      %v35 = vpop.xlane.xlu0 %34
      %v36 = vsel %vm32, %v29, 0.0
      %37 = vadd.xlane.f32.xlu0 %v36
      %v38 = vpop.xlane.xlu0 %37
      %v39 = vrcp.pop 32.0
      %v40 = vmul.f32 32.0, %v39
      %v41 = vsub.f32 1.0, %v40
      %v42 = vmul.f32 %v39, %v41
      %v43 = vadd.f32 %v39, %v42
      %vm44 = vweird.f32 %v39
      %v45 = vsel %vm44, %v39, %v43
      %v46 = vmul.f32 %v35, %v45
      %v47 = vmul.f32 %v38, %v45
      %v48 = vsub.f32 %v28, %v46
      %v49 = vsub.f32 %v29, %v47
      %v50 = vmul.f32 %v48, %v48
      %v51 = vmul.f32 %v49, %v49
      %v52 = vsel %vm32, %v50, 0.0
      %53 = vadd.xlane.f32.xlu0 %v52
      %v54 = vpop.xlane.xlu0 %53
      %v55 = vsel %vm32, %v51, 0.0
      %56 = vadd.xlane.f32.xlu0 %v55
      %v57 = vpop.xlane.xlu0 %56
      %v58 = vmul.f32 %v54, %v45
      %v59 = vmul.f32 %v57, %v45
      %v60 = vadd.f32 %v58, 1e-05
      %v61 = vadd.f32 %v59, 1e-05
      %v62 = vrsqrt.pop %v60
      %v63 = vmul.f32 %v62, %v60
      %v64 = vmul.f32 %v63, %v62
      %v65 = vmul.f32 0.5, %v64
      %v66 = vsub.f32 1.5, %v65
      %v67 = vmul.f32 %v62, %v66
      %vm68 = vweird.f32 %v60
      %vm69 = vweird.f32 %v62
      %vm70 = vmor %vm68, %vm69
      %v71 = vsel %vm70, %v62, %v67
      %v72 = vrsqrt.pop %v61
      %v73 = vmul.f32 %v72, %v61
      %v74 = vmul.f32 %v73, %v72
      %v75 = vmul.f32 0.5, %v74
      %v76 = vsub.f32 1.5, %v75
      %v77 = vmul.f32 %v72, %v76
      %vm78 = vweird.f32 %v61
      %vm79 = vweird.f32 %v72
      %vm80 = vmor %vm78, %vm79
      %v81 = vsel %vm80, %v72, %v77
      %v82 = vmul.f32 %v48, %v71
      %v83 = vmul.f32 %v49, %v81
      %v85 = vperm.slane %v30, 0
      %v87 = vmul.f32 %v82, %v85
      %v88 = vmul.f32 %v83, %v85
      %v90 = vperm.slane %v31, 0
      %v92 = vadd.f32 %v87, %v90
      %v93 = vadd.f32 %v88, %v90
      %v94 = vpack.c.bf16 %v92, %v92
      %v95 = vpack.c.bf16 %v93, %v93
      %vm96 = vcmask 257024
      %97 = vst.msk [vmem:[#allocation2] sm:$0xf] %vm96, %v94
      %98 = vst.msk [vmem:[#allocation2 + $0x4] sm:$0xf] %vm96, %v95
    $region25: #{_lambda_.17} parent=1 // pred_fallthru
      _
    %v99 = vld [vmem:[%s3] sm:$0xf]
    %v100 = vld [vmem:[%s3 + $0x4] sm:$0xf]
    %v101 = vld [vmem:[%s4] sm:$0x1]
    %v102 = vld [vmem:[#allocation2] sm:$0xf]
    %v103 = vld [vmem:[#allocation2 + $0x4] sm:$0xf]
    %v105 = vperm.slane %v101, 0
    %v109 = vunpack.c.l.b16 %v102
    %v110 = vunpack.c.l.b16 %v103
    %v111 = vpack.c.b16 %v110, %v109
    %v114 = vunpack.c.l.b16 %v99
    %v115 = vunpack.c.l.b16 %v100
    %v116 = vpack.c.b16 %v115, %v114
    %vm118 = vcmask 130048
    %v120 = vsel %vm118, %v111, 0
    %122 = vmatpush.bf16.msra.mxu0 0
    %123 = vmatpush.bf16.msra.mxu0 0
    %124 = vmatpush.bf16.msra.mxu0 0
    %125 = vmatpush.bf16.msra.mxu0 0
    %126 = vmatpush.bf16.msra.mxu0 0
    %127 = vmatpush.bf16.msra.mxu0 0
    %128 = vmatpush.bf16.msra.mxu0 0
    %129 = vmatpush.bf16.msra.mxu0 %v116
    %130 = vmatmul.bf16.gmra.mxu0 %v120
    %v131 = vpop.f32.mrf.mxu0
    %v132 = vadd.f32 %v105, %v131
    %v133 = vpop.f32.mrf.mxu0
    %v134 = vadd.f32 %v105, %v133
    %135 = vdwg.mxu0
    %v138 = vrot.slane %v132, 1
    %v139 = vrot.slane %v132, 2
    %v140 = vrot.slane %v132, 3
    %v141 = vrot.slane %v132, 4
    %v142 = vrot.slane %v132, 5
    %v143 = vrot.slane %v132, 6
    %v144 = vrot.slane %v132, 7
    %v145 = vrot.slane %v134, 1
    %v146 = vrot.slane %v134, 2
    %v147 = vrot.slane %v134, 3
    %v148 = vrot.slane %v134, 4
    %v149 = vrot.slane %v134, 5
    %v150 = vrot.slane %v134, 6
    %v151 = vrot.slane %v134, 7
    %vm166 = vcmask 122880
    %167 = vst.msk [vmem:[#allocation3] sm:$0x1] %vm166, %v132
    %168 = vst.msk [vmem:[#allocation3 + $0x2] sm:$0x1] %vm166, %v138
    %169 = vst.msk [vmem:[#allocation3 + $0x4] sm:$0x1] %vm166, %v139
    %170 = vst.msk [vmem:[#allocation3 + $0x6] sm:$0x1] %vm166, %v140
    %171 = vst.msk [vmem:[#allocation3 + $0x8] sm:$0x1] %vm166, %v141
    %172 = vst.msk [vmem:[#allocation3 + $0xa] sm:$0x1] %vm166, %v142
    %173 = vst.msk [vmem:[#allocation3 + $0xc] sm:$0x1] %vm166, %v143
    %174 = vst.msk [vmem:[#allocation3 + $0xe] sm:$0x1] %vm166, %v144
    %175 = vst.msk [vmem:[#allocation3 + $0x10] sm:$0x1] %vm166, %v134
    %176 = vst.msk [vmem:[#allocation3 + $0x12] sm:$0x1] %vm166, %v145
    %177 = vst.msk [vmem:[#allocation3 + $0x14] sm:$0x1] %vm166, %v146
    %178 = vst.msk [vmem:[#allocation3 + $0x16] sm:$0x1] %vm166, %v147
    %179 = vst.msk [vmem:[#allocation3 + $0x18] sm:$0x1] %vm166, %v148
    %180 = vst.msk [vmem:[#allocation3 + $0x1a] sm:$0x1] %vm166, %v149
    %181 = vst.msk [vmem:[#allocation3 + $0x1c] sm:$0x1] %vm166, %v150
    %182 = vst.msk [vmem:[#allocation3 + $0x1e] sm:$0x1] %vm166, %v151
    %v183 = vld [vmem:[#allocation2] sm:$0xf]
    %v184 = vld [vmem:[#allocation2 + $0x4] sm:$0xf]
    %v187 = vunpack.c.l.b16 %v183
    %v188 = vunpack.c.l.b16 %v184
    %v189 = vpack.c.b16 %v188, %v187
    %190 = vrot.lane.b32.xlu0 %v189, 112
    %v191 = vpop.permute.xlu0 %190
    %v193 = vsel %vm118, %v191, 0
    %195 = vmatpush.bf16.msra.mxu0 0
    %196 = vmatpush.bf16.msra.mxu0 0
    %197 = vmatpush.bf16.msra.mxu0 0
    %198 = vmatpush.bf16.msra.mxu0 0
    %199 = vmatpush.bf16.msra.mxu0 0
    %200 = vmatpush.bf16.msra.mxu0 0
    %201 = vmatpush.bf16.msra.mxu0 0
    %202 = vmatpush.bf16.msra.mxu0 %v116
    %203 = vmatmul.bf16.gmra.mxu0 %v193
    %v204 = vpop.f32.mrf.mxu0
    %v205 = vadd.f32 %v105, %v204
    %v206 = vpop.f32.mrf.mxu0
    %v207 = vadd.f32 %v105, %v206
    %208 = vdwg.mxu0
    %v211 = vrot.slane %v205, 1
    %v212 = vrot.slane %v205, 2
    %v213 = vrot.slane %v205, 3
    %v214 = vrot.slane %v205, 4
    %v215 = vrot.slane %v205, 5
    %v216 = vrot.slane %v205, 6
    %v217 = vrot.slane %v205, 7
    %v218 = vrot.slane %v207, 1
    %v219 = vrot.slane %v207, 2
    %v220 = vrot.slane %v207, 3
    %v221 = vrot.slane %v207, 4
    %v222 = vrot.slane %v207, 5
    %v223 = vrot.slane %v207, 6
    %v224 = vrot.slane %v207, 7
    %239 = vst.msk [vmem:[#allocation3 + $0x1] sm:$0x1] %vm166, %v205
    %240 = vst.msk [vmem:[#allocation3 + $0x3] sm:$0x1] %vm166, %v211
    %241 = vst.msk [vmem:[#allocation3 + $0x5] sm:$0x1] %vm166, %v212
    %242 = vst.msk [vmem:[#allocation3 + $0x7] sm:$0x1] %vm166, %v213
    %243 = vst.msk [vmem:[#allocation3 + $0x9] sm:$0x1] %vm166, %v214
    %244 = vst.msk [vmem:[#allocation3 + $0xb] sm:$0x1] %vm166, %v215
    %245 = vst.msk [vmem:[#allocation3 + $0xd] sm:$0x1] %vm166, %v216
    %246 = vst.msk [vmem:[#allocation3 + $0xf] sm:$0x1] %vm166, %v217
    %247 = vst.msk [vmem:[#allocation3 + $0x11] sm:$0x1] %vm166, %v207
    %248 = vst.msk [vmem:[#allocation3 + $0x13] sm:$0x1] %vm166, %v218
    %249 = vst.msk [vmem:[#allocation3 + $0x15] sm:$0x1] %vm166, %v219
    %250 = vst.msk [vmem:[#allocation3 + $0x17] sm:$0x1] %vm166, %v220
    %251 = vst.msk [vmem:[#allocation3 + $0x19] sm:$0x1] %vm166, %v221
    %252 = vst.msk [vmem:[#allocation3 + $0x1b] sm:$0x1] %vm166, %v222
    %253 = vst.msk [vmem:[#allocation3 + $0x1d] sm:$0x1] %vm166, %v223
    %254 = vst.msk [vmem:[#allocation3 + $0x1f] sm:$0x1] %vm166, %v224
    // Predicated region
    $region26: #{_lambda_.17} parent=1 // pred_check
      _
    $region27: #{_lambda_.17} parent=1 // pred_check_branch
      %256 = sbr.rel (0) target = $region29
    $region28: #{_lambda_.17} parent=1 // pred_region
      %258 = vsyncadd [#allocation4], 0
      %s259 = sshll.u32 [#allocation3], 4
      %s260 = int_to_ptr.vmem [resolvable:$true] %s259
      %s261 = sshll.u32 %s5, 4
      %s262 = int_to_ptr.hbm [resolvable:$true] %s261
      %267 = dma.vmem_to_hbm [thread:$0]  %s260, 512, %s262, [#allocation4], 32, 32, 2
    $region29: #{_lambda_.17} parent=1 // pred_fallthru
      _
    // Predicated region
    $region30: #{_lambda_.17} parent=1 // pred_check
      _
    $region31: #{_lambda_.17} parent=1 // pred_check_branch
      %269 = sbr.rel (0) target = $region33
    $region32: #{_lambda_.17} parent=1 // pred_region
      %271 = dma.done [#allocation4], 512
    $region33: #{_lambda_.17} parent=1 // pred_fallthru
      _
    %272 = vsyncpa [#allocation4], 1

</llo_original>
